<compile_context>
chip_gen: v7x
topology: tpu7x:2x2x1
jax: 0.10.0
libtpu: 0.0.40
codegen_flags: <defaults>
</compile_context>

<pallas_src>
import functools

import jax
import jax.numpy as jnp
from jax.experimental import pallas as pl
from jax.experimental.pallas import tpu as pltpu


def _block_kernel(x_ref, ln1w_ref, ln1b_ref, wq_ref, wkv_ref,
                  wproj_ref, bproj_ref, g1_ref, ln2w_ref, ln2b_ref,
                  wfc1_ref, bfc1_ref, wfc2_ref, bfc2_ref, g2_ref,
                  o_ref, q_scr, kv_scr,
                  *, num_heads, head_dim, block_q, ln_eps):
    cdt = wq_ref.dtype                        # compute / MXU dtype (e.g. bf16)
    C = num_heads * head_dim

    def layernorm(v32, w_ref, b_ref):
        mu = jnp.mean(v32, axis=-1, keepdims=True)
        c = v32 - mu
        var = jnp.mean(c * c, axis=-1, keepdims=True)
        return c * jax.lax.rsqrt(var + ln_eps) * w_ref[...] + b_ref[...]

    # ---- Hoisted: LN1 + Q/KV projections over the full sequence, once/batch -
    @pl.when(pl.program_id(1) == 0)
    def _():
        h_full = layernorm(x_ref[...].astype(jnp.float32),
                           ln1w_ref, ln1b_ref).astype(cdt)          # (N, C)
        q_scr[...] = jnp.dot(h_full, wq_ref[...],                   # scale folded
                             preferred_element_type=jnp.float32).astype(cdt)
        kv_scr[...] = jnp.dot(h_full, wkv_ref[...],                 # fused K|V
                              preferred_element_type=jnp.float32).astype(cdt)

    # ---- Query tile ----------------------------------------------------------
    row_off = pl.multiple_of(pl.program_id(1) * block_q, block_q)
    x_q32 = x_ref[pl.ds(row_off, block_q), :].astype(jnp.float32)   # (bq, C) f32
    q_tile = q_scr[pl.ds(row_off, block_q), :]                      # (bq, C) cdt

    # ---- Per-head softmax attention; lane-dense context assembly ------------
    ctx_heads = []
    for h in range(num_heads):
        lo = h * head_dim
        qh = q_tile[:, lo:lo + head_dim]                 # (bq, hd)
        kh = kv_scr[:, lo:lo + head_dim]                 # (N,  hd)
        vh = kv_scr[:, C + lo:C + lo + head_dim]         # (N,  hd)
        s = jax.lax.dot_general(qh, kh, (((1,), (1,)), ((), ())),
                                preferred_element_type=jnp.float32)  # (bq, N)
        s = s - jnp.max(s, axis=-1, keepdims=True)
        p = jnp.exp(s)
        inv = pl.reciprocal(jnp.sum(p, axis=-1, keepdims=True))      # (bq, 1)
        ctx_h = jnp.dot(p.astype(cdt), vh,
                        preferred_element_type=jnp.float32)          # (bq, hd)
        ctx_heads.append(ctx_h * inv)                    # normalize after PV
    ctx = jnp.concatenate(ctx_heads, axis=-1)            # (bq, C) f32, lane-dense

    # ---- Output projection + LayerScale + residual ---------------------------
    attn_out = jnp.dot(ctx.astype(cdt), wproj_ref[...],
                       preferred_element_type=jnp.float32) + bproj_ref[...]
    x1 = x_q32 + attn_out * g1_ref[...]                              # (bq, C) f32

    # ---- MLP: LN2 -> fc1 -> GELU -> fc2, LayerScale + residual ---------------
    h2 = layernorm(x1, ln2w_ref, ln2b_ref).astype(cdt)
    hid = jnp.dot(h2, wfc1_ref[...],
                  preferred_element_type=jnp.float32) + bfc1_ref[...]
    hid = jax.nn.gelu(hid, approximate=True).astype(cdt)
    mlp_out = jnp.dot(hid, wfc2_ref[...],
                      preferred_element_type=jnp.float32) + bfc2_ref[...]
    o_ref[...] = (x1 + mlp_out * g2_ref[...]).astype(o_ref.dtype)


def block_forward(x, params, *, num_heads, block_q=None,
                  compute_dtype=jnp.bfloat16, ln_eps=1e-5,
                  vmem_limit_bytes=None):
    """Pallas implementation of Block.forward (inference defaults).

    x: (B, N, C).  params use PyTorch conventions:
      ln1_w, ln1_b, ln2_w, ln2_b : (C,)
      w_qkv : (3C, C)   (nn.Linear weight, out x in; q|k|v stacked, no bias)
      w_proj: (C, C), b_proj: (C,)
      w_fc1 : (Hm, C), b_fc1: (Hm,)
      w_fc2 : (C, Hm), b_fc2: (C,)
      gamma1, gamma2 : (C,)   (LayerScale; ones == Identity)
    """
    B, N, C = x.shape
    assert C % num_heads == 0
    head_dim = C // num_heads
    scale = head_dim ** (-0.5)
    Hm = params["w_fc1"].shape[0]
    out_dtype = x.dtype

    if block_q is None:
        # 256 feeds the 256-wide MXU on v6e/v7x; 128 is plenty on v5e.
        block_q = N if N <= 256 else 256
    assert N % block_q == 0
    if jnp.dtype(out_dtype).itemsize < 4:
        assert block_q % 16 == 0 or block_q == N, "bf16 output needs 16-row tiles"
    else:
        assert block_q % 8 == 0 or block_q == N
    n_q = N // block_q

    f32 = jnp.float32
    wqkv = params["w_qkv"]                                   # (3C, C)
    w_q = (wqkv[:C].T * scale).astype(compute_dtype)         # (C, C), scale folded
    w_kv = wqkv[C:].T.astype(compute_dtype)                  # (C, 2C) fused K|V
    w_proj = params["w_proj"].T.astype(compute_dtype)        # (C, C)
    w_fc1 = params["w_fc1"].T.astype(compute_dtype)          # (C, Hm)
    w_fc2 = params["w_fc2"].T.astype(compute_dtype)          # (Hm, C)

    row = lambda v: jnp.asarray(v, f32).reshape(1, -1)
    ones = jnp.ones((C,), f32)
    ln1_w, ln1_b = row(params["ln1_w"]), row(params["ln1_b"])
    ln2_w, ln2_b = row(params["ln2_w"]), row(params["ln2_b"])
    b_proj = row(params["b_proj"])
    b_fc1 = row(params["b_fc1"])
    b_fc2 = row(params["b_fc2"])
    gamma1 = row(params.get("gamma1", ones))
    gamma2 = row(params.get("gamma2", ones))

    # Residual stream stays f32; MXU operands are cast inside the kernel.
    x_f32 = x.astype(f32)

    kernel = functools.partial(_block_kernel, num_heads=num_heads,
                               head_dim=head_dim, block_q=block_q,
                               ln_eps=ln_eps)

    # Constant weights: index never changes -> single-buffer (halves weight VMEM).
    def const(shape):
        return pl.BlockSpec(shape, lambda b, t: (0,) * len(shape),
                            pipeline_mode=pl.Buffered(1))

    grid_spec = pltpu.PrefetchScalarGridSpec(
        num_scalar_prefetch=0,
        grid=(B, n_q),
        in_specs=[
            pl.BlockSpec((None, N, C), lambda b, t: (b, 0, 0)),  # x, full seq, f32
            const((1, C)), const((1, C)),                        # ln1 w, b
            const((C, C)),                                       # w_q (scaled)
            const((C, 2 * C)),                                   # w_kv fused
            const((C, C)), const((1, C)),                        # proj w, b
            const((1, C)),                                       # gamma1
            const((1, C)), const((1, C)),                        # ln2 w, b
            const((C, Hm)), const((1, Hm)),                      # fc1 w, b
            const((Hm, C)), const((1, C)),                       # fc2 w, b
            const((1, C)),                                       # gamma2
        ],
        out_specs=pl.BlockSpec((None, block_q, C), lambda b, t: (b, t, 0)),
        scratch_shapes=[
            pltpu.VMEM((N, C), compute_dtype),                   # q (scaled), per batch
            pltpu.VMEM((N, 2 * C), compute_dtype),               # k|v, per batch
        ],
    )

    # Explicit VMEM budget: resident weights + x/out blocks + scratch + f32
    # intermediates, with ~30% headroom (don't rely on the default scoped limit).
    if vmem_limit_bytes is None:
        cb = jnp.dtype(compute_dtype).itemsize
        ob = jnp.dtype(out_dtype).itemsize
        w_bytes = (C * C + C * 2 * C + C * C + C * Hm + Hm * C) * cb  # single-buffered
        vec_bytes = (8 * C + Hm) * 4
        x_bytes = 2 * N * C * 4                                       # double-buffered
        o_bytes = 2 * block_q * C * ob                                # double-buffered
        scr_bytes = (N * C + N * 2 * C) * cb
        inter_bytes = (N * 3 * C + 2 * block_q * N
                       + block_q * Hm + 4 * block_q * C) * 4
        est = w_bytes + vec_bytes + x_bytes + o_bytes + scr_bytes + inter_bytes
        vmem_limit_bytes = min(max(int(est * 1.3), 32 << 20), 128 << 20)

    return pl.pallas_call(
        kernel,
        out_shape=jax.ShapeDtypeStruct((B, N, C), out_dtype),
        grid_spec=grid_spec,
        compiler_params=pltpu.CompilerParams(
            # t must be "arbitrary": the q/kv scratch is filled at t==0 and
            # reused across query tiles of the same batch element.
            dimension_semantics=("parallel", "arbitrary"),
            vmem_limit_bytes=vmem_limit_bytes),
    )(x_f32, ln1_w, ln1_b, w_q, w_kv, w_proj, b_proj, gamma1,
      ln2_w, ln2_b, w_fc1, b_fc1, w_fc2, b_fc2, gamma2)


def _reference(x, params, *, num_heads, ln_eps=1e-5):
    """Pure-JAX f32 reference mirroring the PyTorch Block.forward."""
    B, N, C = x.shape
    hd = C // num_heads
    scale = hd ** (-0.5)

    def ln(v, w, b):
        mu = v.mean(-1, keepdims=True)
        var = ((v - mu) ** 2).mean(-1, keepdims=True)
        return (v - mu) / jnp.sqrt(var + ln_eps) * w + b

    h = ln(x, params["ln1_w"], params["ln1_b"])
    qkv = h @ params["w_qkv"].T                                   # (B, N, 3C)
    qkv = qkv.reshape(B, N, 3, num_heads, hd).transpose(2, 0, 3, 1, 4)
    q, k, v = qkv[0], qkv[1], qkv[2]                              # (B, H, N, hd)
    attn = jax.nn.softmax((q * scale) @ k.transpose(0, 1, 3, 2), axis=-1)
    o = (attn @ v).transpose(0, 2, 1, 3).reshape(B, N, C)
    o = o @ params["w_proj"].T + params["b_proj"]
    x = x + o * params["gamma1"]
    h2 = ln(x, params["ln2_w"], params["ln2_b"])
    m = jax.nn.gelu(h2 @ params["w_fc1"].T + params["b_fc1"], approximate=True)
    m = m @ params["w_fc2"].T + params["b_fc2"]
    return x + m * params["gamma2"]


if __name__ == "__main__":
    # Small shapes consistent with the module (dim divisible by num_heads).
    B, N, C = 2, 16, 64
    num_heads = 4
    mlp_hidden = 4 * C          # mlp_ratio = 4.0

    key = jax.random.PRNGKey(0)
    ks = jax.random.split(key, 12)
    x = jax.random.normal(ks[0], (B, N, C), dtype=jnp.float32)

    def w(k, shape, s=0.05):
        return jax.random.normal(k, shape, dtype=jnp.float32) * s

    params = {
        "ln1_w": jnp.ones((C,), jnp.float32) + w(ks[1], (C,), 0.02),
        "ln1_b": w(ks[2], (C,), 0.02),
        "w_qkv": w(ks[3], (3 * C, C)),
        "w_proj": w(ks[4], (C, C)),
        "b_proj": w(ks[5], (C,), 0.02),
        "gamma1": jnp.ones((C,), jnp.float32),   # LayerScale = Identity (init_values=None)
        "ln2_w": jnp.ones((C,), jnp.float32) + w(ks[6], (C,), 0.02),
        "ln2_b": w(ks[7], (C,), 0.02),
        "w_fc1": w(ks[8], (mlp_hidden, C)),
        "b_fc1": w(ks[9], (mlp_hidden,), 0.02),
        "w_fc2": w(ks[10], (C, mlp_hidden)),
        "b_fc2": w(ks[11], (C,), 0.02),
        "gamma2": jnp.ones((C,), jnp.float32),
    }

    out = block_forward(x, params, num_heads=num_heads,
                        compute_dtype=jnp.bfloat16)
    out = jax.block_until_ready(out)

    ref = _reference(x, params, num_heads=num_heads)
    assert out.shape == (B, N, C)
    err = float(jnp.max(jnp.abs(out - ref)))
    # bf16 MXU operands with f32 accumulation -> loosened tolerance vs f32 ref.
    assert jnp.allclose(out, ref, atol=5e-2, rtol=5e-2), f"max abs err {err}"
    print("KERNEL_OK")
</pallas_src>

<mosaic_0001>
module attributes {stable_mosaic.version = 11 : i64} {
  func.func @_block_kernel(%arg0: i32, %arg1: i32, %arg2: memref<1x16x64xf32, #tpu.memory_space<vmem>>, %arg3: memref<1x64xf32, #tpu.memory_space<vmem>>, %arg4: memref<1x64xf32, #tpu.memory_space<vmem>>, %arg5: memref<64x64xbf16, #tpu.memory_space<vmem>>, %arg6: memref<64x128xbf16, #tpu.memory_space<vmem>>, %arg7: memref<64x64xbf16, #tpu.memory_space<vmem>>, %arg8: memref<1x64xf32, #tpu.memory_space<vmem>>, %arg9: memref<1x64xf32, #tpu.memory_space<vmem>>, %arg10: memref<1x64xf32, #tpu.memory_space<vmem>>, %arg11: memref<1x64xf32, #tpu.memory_space<vmem>>, %arg12: memref<64x256xbf16, #tpu.memory_space<vmem>>, %arg13: memref<1x256xf32, #tpu.memory_space<vmem>>, %arg14: memref<256x64xbf16, #tpu.memory_space<vmem>>, %arg15: memref<1x64xf32, #tpu.memory_space<vmem>>, %arg16: memref<1x64xf32, #tpu.memory_space<vmem>>, %arg17: memref<1x16x64xf32, #tpu.memory_space<vmem>>, %arg18: memref<16x64xbf16, #tpu.memory_space<vmem>>, %arg19: memref<16x128xbf16, #tpu.memory_space<vmem>>) attributes {dimension_semantics = [#tpu.dimension_semantics<parallel>, #tpu.dimension_semantics<arbitrary>], iteration_bounds = array<i64: 2, 1>, scalar_prefetch = 0 : i64, scratch_operands = 2 : i64, tpu.core_type = #tpu.core_type<tc>, window_params = [{transform_indices = @transform_0, window_bounds = array<i64: 1, 16, 64>}, {pipeline_mode = #tpu.pipeline_mode<synchronous>, transform_indices = @transform_1, window_bounds = array<i64: 1, 64>}, {pipeline_mode = #tpu.pipeline_mode<synchronous>, transform_indices = @transform_2, window_bounds = array<i64: 1, 64>}, {pipeline_mode = #tpu.pipeline_mode<synchronous>, transform_indices = @transform_3, window_bounds = array<i64: 64, 64>}, {pipeline_mode = #tpu.pipeline_mode<synchronous>, transform_indices = @transform_4, window_bounds = array<i64: 64, 128>}, {pipeline_mode = #tpu.pipeline_mode<synchronous>, transform_indices = @transform_5, window_bounds = array<i64: 64, 64>}, {pipeline_mode = #tpu.pipeline_mode<synchronous>, transform_indices = @transform_6, window_bounds = array<i64: 1, 64>}, {pipeline_mode = #tpu.pipeline_mode<synchronous>, transform_indices = @transform_7, window_bounds = array<i64: 1, 64>}, {pipeline_mode = #tpu.pipeline_mode<synchronous>, transform_indices = @transform_8, window_bounds = array<i64: 1, 64>}, {pipeline_mode = #tpu.pipeline_mode<synchronous>, transform_indices = @transform_9, window_bounds = array<i64: 1, 64>}, {pipeline_mode = #tpu.pipeline_mode<synchronous>, transform_indices = @transform_10, window_bounds = array<i64: 64, 256>}, {pipeline_mode = #tpu.pipeline_mode<synchronous>, transform_indices = @transform_11, window_bounds = array<i64: 1, 256>}, {pipeline_mode = #tpu.pipeline_mode<synchronous>, transform_indices = @transform_12, window_bounds = array<i64: 256, 64>}, {pipeline_mode = #tpu.pipeline_mode<synchronous>, transform_indices = @transform_13, window_bounds = array<i64: 1, 64>}, {pipeline_mode = #tpu.pipeline_mode<synchronous>, transform_indices = @transform_14, window_bounds = array<i64: 1, 64>}, {transform_indices = @transform_15, window_bounds = array<i64: 1, 16, 64>}]} {
    %c0_i32 = arith.constant 0 : i32
    %0 = arith.cmpi eq, %arg1, %c0_i32 : i32
    %1 = arith.extui %0 : i1 to i32
    %c0_i32_0 = arith.constant 0 : i32
    %2 = arith.cmpi ne, %1, %c0_i32_0 : i32
    scf.if %2 {
      %c0_62 = arith.constant 0 : index
      %c0_63 = arith.constant 0 : index
      %c0_64 = arith.constant 0 : index
      %139 = vector.load %arg2[%c0_62, %c0_63, %c0_64] : memref<1x16x64xf32, #tpu.memory_space<vmem>>, vector<1x16x64xf32>
      %140 = vector.shape_cast %139 : vector<1x16x64xf32> to vector<16x64xf32>
      %cst_65 = arith.constant dense<0.000000e+00> : vector<16xf32>
      %141 = vector.multi_reduction <add>, %140, %cst_65 [1] : vector<16x64xf32> to vector<16xf32>
      %142 = vector.shape_cast %141 : vector<16xf32> to vector<16x1xf32>
      %cst_66 = arith.constant 6.400000e+01 : f32
      %143 = vector.broadcast %cst_66 : f32 to vector<16x1xf32>
      %144 = arith.divf %142, %143 : vector<16x1xf32>
      %145 = vector.broadcast %144 : vector<16x1xf32> to vector<16x64xf32>
      %146 = arith.subf %140, %145 : vector<16x64xf32>
      %147 = arith.mulf %146, %146 : vector<16x64xf32>
      %cst_67 = arith.constant dense<0.000000e+00> : vector<16xf32>
      %148 = vector.multi_reduction <add>, %147, %cst_67 [1] : vector<16x64xf32> to vector<16xf32>
      %149 = vector.shape_cast %148 : vector<16xf32> to vector<16x1xf32>
      %cst_68 = arith.constant 6.400000e+01 : f32
      %150 = vector.broadcast %cst_68 : f32 to vector<16x1xf32>
      %151 = arith.divf %149, %150 : vector<16x1xf32>
      %cst_69 = arith.constant 9.99999974E-6 : f32
      %152 = vector.broadcast %cst_69 : f32 to vector<16x1xf32>
      %153 = arith.addf %151, %152 : vector<16x1xf32>
      %154 = math.rsqrt %153 : vector<16x1xf32>
      %155 = vector.broadcast %154 : vector<16x1xf32> to vector<16x64xf32>
      %156 = arith.mulf %146, %155 : vector<16x64xf32>
      %c0_70 = arith.constant 0 : index
      %c0_71 = arith.constant 0 : index
      %157 = vector.load %arg3[%c0_70, %c0_71] : memref<1x64xf32, #tpu.memory_space<vmem>>, vector<1x64xf32>
      %158 = vector.broadcast %157 : vector<1x64xf32> to vector<16x64xf32>
      %159 = arith.mulf %156, %158 : vector<16x64xf32>
      %c0_72 = arith.constant 0 : index
      %c0_73 = arith.constant 0 : index
      %160 = vector.load %arg4[%c0_72, %c0_73] : memref<1x64xf32, #tpu.memory_space<vmem>>, vector<1x64xf32>
      %161 = vector.broadcast %160 : vector<1x64xf32> to vector<16x64xf32>
      %162 = arith.addf %159, %161 : vector<16x64xf32>
      %163 = arith.truncf %162 : vector<16x64xf32> to vector<16x64xbf16>
      %c0_74 = arith.constant 0 : index
      %c0_75 = arith.constant 0 : index
      %164 = vector.load %arg5[%c0_74, %c0_75] : memref<64x64xbf16, #tpu.memory_space<vmem>>, vector<64x64xbf16>
      %cst_76 = arith.constant dense<0.000000e+00> : vector<16x64xf32>
      %165 = tpu.matmul %163, %164, %cst_76 {dimension_numbers = #tpu.dot_dimension_numbers<[1], [0], [0], [1], [0, 0, 1, 1], [], []>} : vector<16x64xbf16>, vector<64x64xbf16>, vector<16x64xf32> -> vector<16x64xf32>
      %166 = arith.truncf %165 : vector<16x64xf32> to vector<16x64xbf16>
      %c0_77 = arith.constant 0 : index
      %c0_78 = arith.constant 0 : index
      %167 = vector.load %arg18[%c0_77, %c0_78] : memref<16x64xbf16, #tpu.memory_space<vmem>>, vector<16x64xbf16>
      tpu.vector_store %arg18[%c0_77, %c0_78], %166 {strides = array<i32>} : memref<16x64xbf16, #tpu.memory_space<vmem>>, vector<16x64xbf16>,
      %c0_79 = arith.constant 0 : index
      %c0_80 = arith.constant 0 : index
      %168 = vector.load %arg6[%c0_79, %c0_80] : memref<64x128xbf16, #tpu.memory_space<vmem>>, vector<64x128xbf16>
      %cst_81 = arith.constant dense<0.000000e+00> : vector<16x128xf32>
      %169 = tpu.matmul %163, %168, %cst_81 {dimension_numbers = #tpu.dot_dimension_numbers<[1], [0], [0], [1], [0, 0, 1, 1], [], []>} : vector<16x64xbf16>, vector<64x128xbf16>, vector<16x128xf32> -> vector<16x128xf32>
      %170 = arith.truncf %169 : vector<16x128xf32> to vector<16x128xbf16>
      %c0_82 = arith.constant 0 : index
      %c0_83 = arith.constant 0 : index
      %171 = vector.load %arg19[%c0_82, %c0_83] : memref<16x128xbf16, #tpu.memory_space<vmem>>, vector<16x128xbf16>
      tpu.vector_store %arg19[%c0_82, %c0_83], %170 {strides = array<i32>} : memref<16x128xbf16, #tpu.memory_space<vmem>>, vector<16x128xbf16>,
    } else {
    }
    %c16_i32 = arith.constant 16 : i32
    %3 = arith.muli %arg1, %c16_i32 : i32
    %4 = tpu.assume_multiple %3, 16 : i32
    %c0 = arith.constant 0 : index
    %5 = arith.index_cast %4 : i32 to index
    %c0_1 = arith.constant 0 : index
    %6 = vector.load %arg2[%c0, %5, %c0_1] : memref<1x16x64xf32, #tpu.memory_space<vmem>>, vector<1x16x64xf32>
    %7 = vector.shape_cast %6 : vector<1x16x64xf32> to vector<16x64xf32>
    %8 = arith.index_cast %4 : i32 to index
    %c0_2 = arith.constant 0 : index
    %9 = vector.load %arg18[%8, %c0_2] : memref<16x64xbf16, #tpu.memory_space<vmem>>, vector<16x64xbf16>
    %10 = vector.extract_strided_slice %9 {offsets = [0, 0], sizes = [16, 16], strides = [1, 1]} : vector<16x64xbf16> to vector<16x16xbf16>
    %c0_3 = arith.constant 0 : index
    %c0_4 = arith.constant 0 : index
    %11 = vector.load %arg19[%c0_3, %c0_4] : memref<16x128xbf16, #tpu.memory_space<vmem>>, vector<16x16xbf16>
    %c0_5 = arith.constant 0 : index
    %c64 = arith.constant 64 : index
    %12 = vector.load %arg19[%c0_5, %c64] : memref<16x128xbf16, #tpu.memory_space<vmem>>, vector<16x16xbf16>
    %cst = arith.constant dense<0.000000e+00> : vector<16x16xf32>
    %13 = tpu.matmul %10, %11, %cst {dimension_numbers = #tpu.dot_dimension_numbers<[1], [1], [0], [0], [0, 0, 1, 0], [], []>} : vector<16x16xbf16>, vector<16x16xbf16>, vector<16x16xf32> -> vector<16x16xf32>
    %cst_6 = arith.constant dense<0xFF800000> : vector<16xf32>
    %14 = vector.multi_reduction <maximumf>, %13, %cst_6 [1] : vector<16x16xf32> to vector<16xf32>
    %15 = vector.shape_cast %14 : vector<16xf32> to vector<16x1xf32>
    %16 = vector.broadcast %15 : vector<16x1xf32> to vector<16x16xf32>
    %17 = arith.subf %13, %16 : vector<16x16xf32>
    %18 = math.exp %17 : vector<16x16xf32>
    %cst_7 = arith.constant dense<0.000000e+00> : vector<16xf32>
    %19 = vector.multi_reduction <add>, %18, %cst_7 [1] : vector<16x16xf32> to vector<16xf32>
    %20 = vector.shape_cast %19 : vector<16xf32> to vector<16x1xf32>
    %21 = tpu.reciprocal %20 : vector<16x1xf32> -> vector<16x1xf32>
    %22 = arith.truncf %18 : vector<16x16xf32> to vector<16x16xbf16>
    %cst_8 = arith.constant dense<0.000000e+00> : vector<16x16xf32>
    %23 = tpu.matmul %22, %12, %cst_8 {dimension_numbers = #tpu.dot_dimension_numbers<[1], [0], [0], [1], [0, 0, 1, 1], [], []>} : vector<16x16xbf16>, vector<16x16xbf16>, vector<16x16xf32> -> vector<16x16xf32>
    %24 = vector.broadcast %21 : vector<16x1xf32> to vector<16x16xf32>
    %25 = arith.mulf %23, %24 : vector<16x16xf32>
    %26 = vector.extract_strided_slice %9 {offsets = [0, 16], sizes = [16, 16], strides = [1, 1]} : vector<16x64xbf16> to vector<16x16xbf16>
    %c0_9 = arith.constant 0 : index
    %c16 = arith.constant 16 : index
    %27 = vector.load %arg19[%c0_9, %c16] : memref<16x128xbf16, #tpu.memory_space<vmem>>, vector<16x16xbf16>
    %c0_10 = arith.constant 0 : index
    %c80 = arith.constant 80 : index
    %28 = vector.load %arg19[%c0_10, %c80] : memref<16x128xbf16, #tpu.memory_space<vmem>>, vector<16x16xbf16>
    %cst_11 = arith.constant dense<0.000000e+00> : vector<16x16xf32>
    %29 = tpu.matmul %26, %27, %cst_11 {dimension_numbers = #tpu.dot_dimension_numbers<[1], [1], [0], [0], [0, 0, 1, 0], [], []>} : vector<16x16xbf16>, vector<16x16xbf16>, vector<16x16xf32> -> vector<16x16xf32>
    %cst_12 = arith.constant dense<0xFF800000> : vector<16xf32>
    %30 = vector.multi_reduction <maximumf>, %29, %cst_12 [1] : vector<16x16xf32> to vector<16xf32>
    %31 = vector.shape_cast %30 : vector<16xf32> to vector<16x1xf32>
    %32 = vector.broadcast %31 : vector<16x1xf32> to vector<16x16xf32>
    %33 = arith.subf %29, %32 : vector<16x16xf32>
    %34 = math.exp %33 : vector<16x16xf32>
    %cst_13 = arith.constant dense<0.000000e+00> : vector<16xf32>
    %35 = vector.multi_reduction <add>, %34, %cst_13 [1] : vector<16x16xf32> to vector<16xf32>
    %36 = vector.shape_cast %35 : vector<16xf32> to vector<16x1xf32>
    %37 = tpu.reciprocal %36 : vector<16x1xf32> -> vector<16x1xf32>
    %38 = arith.truncf %34 : vector<16x16xf32> to vector<16x16xbf16>
    %cst_14 = arith.constant dense<0.000000e+00> : vector<16x16xf32>
    %39 = tpu.matmul %38, %28, %cst_14 {dimension_numbers = #tpu.dot_dimension_numbers<[1], [0], [0], [1], [0, 0, 1, 1], [], []>} : vector<16x16xbf16>, vector<16x16xbf16>, vector<16x16xf32> -> vector<16x16xf32>
    %40 = vector.broadcast %37 : vector<16x1xf32> to vector<16x16xf32>
    %41 = arith.mulf %39, %40 : vector<16x16xf32>
    %42 = vector.extract_strided_slice %9 {offsets = [0, 32], sizes = [16, 16], strides = [1, 1]} : vector<16x64xbf16> to vector<16x16xbf16>
    %c0_15 = arith.constant 0 : index
    %c32 = arith.constant 32 : index
    %43 = vector.load %arg19[%c0_15, %c32] : memref<16x128xbf16, #tpu.memory_space<vmem>>, vector<16x16xbf16>
    %c0_16 = arith.constant 0 : index
    %c96 = arith.constant 96 : index
    %44 = vector.load %arg19[%c0_16, %c96] : memref<16x128xbf16, #tpu.memory_space<vmem>>, vector<16x16xbf16>
    %cst_17 = arith.constant dense<0.000000e+00> : vector<16x16xf32>
    %45 = tpu.matmul %42, %43, %cst_17 {dimension_numbers = #tpu.dot_dimension_numbers<[1], [1], [0], [0], [0, 0, 1, 0], [], []>} : vector<16x16xbf16>, vector<16x16xbf16>, vector<16x16xf32> -> vector<16x16xf32>
    %cst_18 = arith.constant dense<0xFF800000> : vector<16xf32>
    %46 = vector.multi_reduction <maximumf>, %45, %cst_18 [1] : vector<16x16xf32> to vector<16xf32>
    %47 = vector.shape_cast %46 : vector<16xf32> to vector<16x1xf32>
    %48 = vector.broadcast %47 : vector<16x1xf32> to vector<16x16xf32>
    %49 = arith.subf %45, %48 : vector<16x16xf32>
    %50 = math.exp %49 : vector<16x16xf32>
    %cst_19 = arith.constant dense<0.000000e+00> : vector<16xf32>
    %51 = vector.multi_reduction <add>, %50, %cst_19 [1] : vector<16x16xf32> to vector<16xf32>
    %52 = vector.shape_cast %51 : vector<16xf32> to vector<16x1xf32>
    %53 = tpu.reciprocal %52 : vector<16x1xf32> -> vector<16x1xf32>
    %54 = arith.truncf %50 : vector<16x16xf32> to vector<16x16xbf16>
    %cst_20 = arith.constant dense<0.000000e+00> : vector<16x16xf32>
    %55 = tpu.matmul %54, %44, %cst_20 {dimension_numbers = #tpu.dot_dimension_numbers<[1], [0], [0], [1], [0, 0, 1, 1], [], []>} : vector<16x16xbf16>, vector<16x16xbf16>, vector<16x16xf32> -> vector<16x16xf32>
    %56 = vector.broadcast %53 : vector<16x1xf32> to vector<16x16xf32>
    %57 = arith.mulf %55, %56 : vector<16x16xf32>
    %58 = vector.extract_strided_slice %9 {offsets = [0, 48], sizes = [16, 16], strides = [1, 1]} : vector<16x64xbf16> to vector<16x16xbf16>
    %c0_21 = arith.constant 0 : index
    %c48 = arith.constant 48 : index
    %59 = vector.load %arg19[%c0_21, %c48] : memref<16x128xbf16, #tpu.memory_space<vmem>>, vector<16x16xbf16>
    %c0_22 = arith.constant 0 : index
    %c112 = arith.constant 112 : index
    %60 = vector.load %arg19[%c0_22, %c112] : memref<16x128xbf16, #tpu.memory_space<vmem>>, vector<16x16xbf16>
    %cst_23 = arith.constant dense<0.000000e+00> : vector<16x16xf32>
    %61 = tpu.matmul %58, %59, %cst_23 {dimension_numbers = #tpu.dot_dimension_numbers<[1], [1], [0], [0], [0, 0, 1, 0], [], []>} : vector<16x16xbf16>, vector<16x16xbf16>, vector<16x16xf32> -> vector<16x16xf32>
    %cst_24 = arith.constant dense<0xFF800000> : vector<16xf32>
    %62 = vector.multi_reduction <maximumf>, %61, %cst_24 [1] : vector<16x16xf32> to vector<16xf32>
    %63 = vector.shape_cast %62 : vector<16xf32> to vector<16x1xf32>
    %64 = vector.broadcast %63 : vector<16x1xf32> to vector<16x16xf32>
    %65 = arith.subf %61, %64 : vector<16x16xf32>
    %66 = math.exp %65 : vector<16x16xf32>
    %cst_25 = arith.constant dense<0.000000e+00> : vector<16xf32>
    %67 = vector.multi_reduction <add>, %66, %cst_25 [1] : vector<16x16xf32> to vector<16xf32>
    %68 = vector.shape_cast %67 : vector<16xf32> to vector<16x1xf32>
    %69 = tpu.reciprocal %68 : vector<16x1xf32> -> vector<16x1xf32>
    %70 = arith.truncf %66 : vector<16x16xf32> to vector<16x16xbf16>
    %cst_26 = arith.constant dense<0.000000e+00> : vector<16x16xf32>
    %71 = tpu.matmul %70, %60, %cst_26 {dimension_numbers = #tpu.dot_dimension_numbers<[1], [0], [0], [1], [0, 0, 1, 1], [], []>} : vector<16x16xbf16>, vector<16x16xbf16>, vector<16x16xf32> -> vector<16x16xf32>
    %72 = vector.broadcast %69 : vector<16x1xf32> to vector<16x16xf32>
    %73 = arith.mulf %71, %72 : vector<16x16xf32>
    %74 = tpu.concatenate %25, %41, %57, %73 in 1 : vector<16x16xf32>, vector<16x16xf32>, vector<16x16xf32>, vector<16x16xf32> -> vector<16x64xf32>
    %75 = arith.truncf %74 : vector<16x64xf32> to vector<16x64xbf16>
    %c0_27 = arith.constant 0 : index
    %c0_28 = arith.constant 0 : index
    %76 = vector.load %arg7[%c0_27, %c0_28] : memref<64x64xbf16, #tpu.memory_space<vmem>>, vector<64x64xbf16>
    %cst_29 = arith.constant dense<0.000000e+00> : vector<16x64xf32>
    %77 = tpu.matmul %75, %76, %cst_29 {dimension_numbers = #tpu.dot_dimension_numbers<[1], [0], [0], [1], [0, 0, 1, 1], [], []>} : vector<16x64xbf16>, vector<64x64xbf16>, vector<16x64xf32> -> vector<16x64xf32>
    %c0_30 = arith.constant 0 : index
    %c0_31 = arith.constant 0 : index
    %78 = vector.load %arg8[%c0_30, %c0_31] : memref<1x64xf32, #tpu.memory_space<vmem>>, vector<1x64xf32>
    %79 = vector.broadcast %78 : vector<1x64xf32> to vector<16x64xf32>
    %80 = arith.addf %77, %79 : vector<16x64xf32>
    %c0_32 = arith.constant 0 : index
    %c0_33 = arith.constant 0 : index
    %81 = vector.load %arg9[%c0_32, %c0_33] : memref<1x64xf32, #tpu.memory_space<vmem>>, vector<1x64xf32>
    %82 = vector.broadcast %81 : vector<1x64xf32> to vector<16x64xf32>
    %83 = arith.mulf %80, %82 : vector<16x64xf32>
    %84 = arith.addf %7, %83 : vector<16x64xf32>
    %cst_34 = arith.constant dense<0.000000e+00> : vector<16xf32>
    %85 = vector.multi_reduction <add>, %84, %cst_34 [1] : vector<16x64xf32> to vector<16xf32>
    %86 = vector.shape_cast %85 : vector<16xf32> to vector<16x1xf32>
    %cst_35 = arith.constant 6.400000e+01 : f32
    %87 = vector.broadcast %cst_35 : f32 to vector<16x1xf32>
    %88 = arith.divf %86, %87 : vector<16x1xf32>
    %89 = vector.broadcast %88 : vector<16x1xf32> to vector<16x64xf32>
    %90 = arith.subf %84, %89 : vector<16x64xf32>
    %91 = arith.mulf %90, %90 : vector<16x64xf32>
    %cst_36 = arith.constant dense<0.000000e+00> : vector<16xf32>
    %92 = vector.multi_reduction <add>, %91, %cst_36 [1] : vector<16x64xf32> to vector<16xf32>
    %93 = vector.shape_cast %92 : vector<16xf32> to vector<16x1xf32>
    %cst_37 = arith.constant 6.400000e+01 : f32
    %94 = vector.broadcast %cst_37 : f32 to vector<16x1xf32>
    %95 = arith.divf %93, %94 : vector<16x1xf32>
    %cst_38 = arith.constant 9.99999974E-6 : f32
    %96 = vector.broadcast %cst_38 : f32 to vector<16x1xf32>
    %97 = arith.addf %95, %96 : vector<16x1xf32>
    %98 = math.rsqrt %97 : vector<16x1xf32>
    %99 = vector.broadcast %98 : vector<16x1xf32> to vector<16x64xf32>
    %100 = arith.mulf %90, %99 : vector<16x64xf32>
    %c0_39 = arith.constant 0 : index
    %c0_40 = arith.constant 0 : index
    %101 = vector.load %arg10[%c0_39, %c0_40] : memref<1x64xf32, #tpu.memory_space<vmem>>, vector<1x64xf32>
    %102 = vector.broadcast %101 : vector<1x64xf32> to vector<16x64xf32>
    %103 = arith.mulf %100, %102 : vector<16x64xf32>
    %c0_41 = arith.constant 0 : index
    %c0_42 = arith.constant 0 : index
    %104 = vector.load %arg11[%c0_41, %c0_42] : memref<1x64xf32, #tpu.memory_space<vmem>>, vector<1x64xf32>
    %105 = vector.broadcast %104 : vector<1x64xf32> to vector<16x64xf32>
    %106 = arith.addf %103, %105 : vector<16x64xf32>
    %107 = arith.truncf %106 : vector<16x64xf32> to vector<16x64xbf16>
    %c0_43 = arith.constant 0 : index
    %c0_44 = arith.constant 0 : index
    %108 = vector.load %arg12[%c0_43, %c0_44] : memref<64x256xbf16, #tpu.memory_space<vmem>>, vector<64x256xbf16>
    %cst_45 = arith.constant dense<0.000000e+00> : vector<16x256xf32>
    %109 = tpu.matmul %107, %108, %cst_45 {dimension_numbers = #tpu.dot_dimension_numbers<[1], [0], [0], [1], [0, 0, 1, 1], [], []>} : vector<16x64xbf16>, vector<64x256xbf16>, vector<16x256xf32> -> vector<16x256xf32>
    %c0_46 = arith.constant 0 : index
    %c0_47 = arith.constant 0 : index
    %110 = vector.load %arg13[%c0_46, %c0_47] : memref<1x256xf32, #tpu.memory_space<vmem>>, vector<1x256xf32>
    %111 = vector.broadcast %110 : vector<1x256xf32> to vector<16x256xf32>
    %112 = arith.addf %109, %111 : vector<16x256xf32>
    %113 = arith.mulf %112, %112 : vector<16x256xf32>
    %114 = arith.mulf %112, %113 : vector<16x256xf32>
    %cst_48 = arith.constant 4.471500e-02 : f32
    %115 = vector.broadcast %cst_48 : f32 to vector<16x256xf32>
    %116 = arith.mulf %115, %114 : vector<16x256xf32>
    %117 = arith.addf %112, %116 : vector<16x256xf32>
    %cst_49 = arith.constant 0.797884583 : f32
    %118 = vector.broadcast %cst_49 : f32 to vector<16x256xf32>
    %119 = arith.mulf %118, %117 : vector<16x256xf32>
    %120 = math.tanh %119 : vector<16x256xf32>
    %cst_50 = arith.constant 1.000000e+00 : f32
    %121 = vector.broadcast %cst_50 : f32 to vector<16x256xf32>
    %122 = arith.addf %121, %120 : vector<16x256xf32>
    %cst_51 = arith.constant 5.000000e-01 : f32
    %123 = vector.broadcast %cst_51 : f32 to vector<16x256xf32>
    %124 = arith.mulf %123, %122 : vector<16x256xf32>
    %125 = arith.mulf %112, %124 : vector<16x256xf32>
    %126 = arith.truncf %125 : vector<16x256xf32> to vector<16x256xbf16>
    %c0_52 = arith.constant 0 : index
    %c0_53 = arith.constant 0 : index
    %127 = vector.load %arg14[%c0_52, %c0_53] : memref<256x64xbf16, #tpu.memory_space<vmem>>, vector<256x64xbf16>
    %cst_54 = arith.constant dense<0.000000e+00> : vector<16x64xf32>
    %128 = tpu.matmul %126, %127, %cst_54 {dimension_numbers = #tpu.dot_dimension_numbers<[1], [0], [0], [1], [0, 0, 1, 1], [], []>} : vector<16x256xbf16>, vector<256x64xbf16>, vector<16x64xf32> -> vector<16x64xf32>
    %c0_55 = arith.constant 0 : index
    %c0_56 = arith.constant 0 : index
    %129 = vector.load %arg15[%c0_55, %c0_56] : memref<1x64xf32, #tpu.memory_space<vmem>>, vector<1x64xf32>
    %130 = vector.broadcast %129 : vector<1x64xf32> to vector<16x64xf32>
    %131 = arith.addf %128, %130 : vector<16x64xf32>
    %c0_57 = arith.constant 0 : index
    %c0_58 = arith.constant 0 : index
    %132 = vector.load %arg16[%c0_57, %c0_58] : memref<1x64xf32, #tpu.memory_space<vmem>>, vector<1x64xf32>
    %133 = vector.broadcast %132 : vector<1x64xf32> to vector<16x64xf32>
    %134 = arith.mulf %131, %133 : vector<16x64xf32>
    %135 = arith.addf %84, %134 : vector<16x64xf32>
    %c0_59 = arith.constant 0 : index
    %c0_60 = arith.constant 0 : index
    %c0_61 = arith.constant 0 : index
    %136 = vector.load %arg17[%c0_59, %c0_60, %c0_61] : memref<1x16x64xf32, #tpu.memory_space<vmem>>, vector<1x16x64xf32>
    %137 = vector.shape_cast %136 : vector<1x16x64xf32> to vector<16x64xf32>
    %138 = vector.shape_cast %135 : vector<16x64xf32> to vector<1x16x64xf32>
    tpu.vector_store %arg17[%c0_59, %c0_60, %c0_61], %138 {strides = array<i32>} : memref<1x16x64xf32, #tpu.memory_space<vmem>>, vector<1x16x64xf32>,
    return
  }
  func.func @transform_0(%arg0: i32, %arg1: i32) -> (i32, i32, i32) {
    %c0_i32 = arith.constant 0 : i32
    %c0_i32_0 = arith.constant 0 : i32
    %c0_i32_1 = arith.constant 0 : i32
    return %arg0, %c0_i32, %c0_i32_0 : i32, i32, i32
  }
  func.func @transform_1(%arg0: i32, %arg1: i32) -> (i32, i32) {
    %c0_i32 = arith.constant 0 : i32
    %c0_i32_0 = arith.constant 0 : i32
    %c0_i32_1 = arith.constant 0 : i32
    return %c0_i32, %c0_i32_0 : i32, i32
  }
  func.func @transform_2(%arg0: i32, %arg1: i32) -> (i32, i32) {
    %c0_i32 = arith.constant 0 : i32
    %c0_i32_0 = arith.constant 0 : i32
    %c0_i32_1 = arith.constant 0 : i32
    return %c0_i32, %c0_i32_0 : i32, i32
  }
  func.func @transform_3(%arg0: i32, %arg1: i32) -> (i32, i32) {
    %c0_i32 = arith.constant 0 : i32
    %c0_i32_0 = arith.constant 0 : i32
    %c0_i32_1 = arith.constant 0 : i32
    return %c0_i32, %c0_i32_0 : i32, i32
  }
  func.func @transform_4(%arg0: i32, %arg1: i32) -> (i32, i32) {
    %c0_i32 = arith.constant 0 : i32
    %c0_i32_0 = arith.constant 0 : i32
    %c0_i32_1 = arith.constant 0 : i32
    return %c0_i32, %c0_i32_0 : i32, i32
  }
  func.func @transform_5(%arg0: i32, %arg1: i32) -> (i32, i32) {
    %c0_i32 = arith.constant 0 : i32
    %c0_i32_0 = arith.constant 0 : i32
    %c0_i32_1 = arith.constant 0 : i32
    return %c0_i32, %c0_i32_0 : i32, i32
  }
  func.func @transform_6(%arg0: i32, %arg1: i32) -> (i32, i32) {
    %c0_i32 = arith.constant 0 : i32
    %c0_i32_0 = arith.constant 0 : i32
    %c0_i32_1 = arith.constant 0 : i32
    return %c0_i32, %c0_i32_0 : i32, i32
  }
  func.func @transform_7(%arg0: i32, %arg1: i32) -> (i32, i32) {
    %c0_i32 = arith.constant 0 : i32
    %c0_i32_0 = arith.constant 0 : i32
    %c0_i32_1 = arith.constant 0 : i32
    return %c0_i32, %c0_i32_0 : i32, i32
  }
  func.func @transform_8(%arg0: i32, %arg1: i32) -> (i32, i32) {
    %c0_i32 = arith.constant 0 : i32
    %c0_i32_0 = arith.constant 0 : i32
    %c0_i32_1 = arith.constant 0 : i32
    return %c0_i32, %c0_i32_0 : i32, i32
  }
  func.func @transform_9(%arg0: i32, %arg1: i32) -> (i32, i32) {
    %c0_i32 = arith.constant 0 : i32
    %c0_i32_0 = arith.constant 0 : i32
    %c0_i32_1 = arith.constant 0 : i32
    return %c0_i32, %c0_i32_0 : i32, i32
  }
  func.func @transform_10(%arg0: i32, %arg1: i32) -> (i32, i32) {
    %c0_i32 = arith.constant 0 : i32
    %c0_i32_0 = arith.constant 0 : i32
    %c0_i32_1 = arith.constant 0 : i32
    return %c0_i32, %c0_i32_0 : i32, i32
  }
  func.func @transform_11(%arg0: i32, %arg1: i32) -> (i32, i32) {
    %c0_i32 = arith.constant 0 : i32
    %c0_i32_0 = arith.constant 0 : i32
    %c0_i32_1 = arith.constant 0 : i32
    return %c0_i32, %c0_i32_0 : i32, i32
  }
  func.func @transform_12(%arg0: i32, %arg1: i32) -> (i32, i32) {
    %c0_i32 = arith.constant 0 : i32
    %c0_i32_0 = arith.constant 0 : i32
    %c0_i32_1 = arith.constant 0 : i32
    return %c0_i32, %c0_i32_0 : i32, i32
  }
  func.func @transform_13(%arg0: i32, %arg1: i32) -> (i32, i32) {
    %c0_i32 = arith.constant 0 : i32
    %c0_i32_0 = arith.constant 0 : i32
    %c0_i32_1 = arith.constant 0 : i32
    return %c0_i32, %c0_i32_0 : i32, i32
  }
  func.func @transform_14(%arg0: i32, %arg1: i32) -> (i32, i32) {
    %c0_i32 = arith.constant 0 : i32
    %c0_i32_0 = arith.constant 0 : i32
    %c0_i32_1 = arith.constant 0 : i32
    return %c0_i32, %c0_i32_0 : i32, i32
  }
  func.func @transform_15(%arg0: i32, %arg1: i32) -> (i32, i32, i32) {
    %c0_i32 = arith.constant 0 : i32
    %c0_i32_0 = arith.constant 0 : i32
    return %arg0, %arg1, %c0_i32 : i32, i32, i32
  }
}

</mosaic_0001>

<llo_original>
// kernel: tpu_custom_call.1
$region0: #{tpu_custom_call.1}
  #allocation0 [shape = 'u32[]', space=smem, size = 0x4, offset = 0x4, fixed_abs, tag = 'smem constant byte address 0x4 - core index']
  #allocation1 [shape = 'u32[144,128]{1,0:T(1,128)}', space=vmem, size = 0x12000, scoped, tag = 'internal scratch']
  #allocation2 [shape = 'bf16[16,64]{1,0:T(16,128)(2,1)}', space=vmem, size = 0x1000, scoped, tag = 'scratch operand']
  #allocation3 [shape = 'bf16[16,128]{1,0:T(16,128)(2,1)}', space=vmem, size = 0x1000, scoped, tag = 'scratch operand']
  %s0 = inlined_call_operand.vmem [shape: f32[2,16,64], index: 0, kind: input, shape index: {}]
  %s1 = inlined_call_operand.vmem [shape: f32[1,64], index: 1, kind: input, shape index: {}]
  %s2 = inlined_call_operand.vmem [shape: f32[1,64], index: 2, kind: input, shape index: {}]
  %s3 = inlined_call_operand.vmem [shape: bf16[64,64], index: 3, kind: input, shape index: {}]
  %s4 = inlined_call_operand.vmem [shape: bf16[64,128], index: 4, kind: input, shape index: {}]
  %s5 = inlined_call_operand.vmem [shape: bf16[64,64], index: 5, kind: input, shape index: {}]
  %s6 = inlined_call_operand.vmem [shape: f32[1,64], index: 6, kind: input, shape index: {}]
  %s7 = inlined_call_operand.vmem [shape: f32[1,64], index: 7, kind: input, shape index: {}]
  %s8 = inlined_call_operand.vmem [shape: f32[1,64], index: 8, kind: input, shape index: {}]
  %s9 = inlined_call_operand.vmem [shape: f32[1,64], index: 9, kind: input, shape index: {}]
  %s10 = inlined_call_operand.vmem [shape: bf16[64,256], index: 10, kind: input, shape index: {}]
  %s11 = inlined_call_operand.vmem [shape: f32[1,256], index: 11, kind: input, shape index: {}]
  %s12 = inlined_call_operand.vmem [shape: bf16[256,64], index: 12, kind: input, shape index: {}]
  %s13 = inlined_call_operand.vmem [shape: f32[1,64], index: 13, kind: input, shape index: {}]
  %s14 = inlined_call_operand.vmem [shape: f32[1,64], index: 14, kind: input, shape index: {}]
  %s15 = inlined_call_operand.hbm [shape: f32[2,16,64], index: 15, kind: output, shape index: {}]
  %s16 = sld [smem:[#allocation0]]
  $region97: #{tpu_custom_call.1} parent=0
    _
  %s18 = ssub.s32 1, %s16
  %s19 = scalar_select 0, %s18, %s16
  $region1: #{tpu_custom_call.1} parent=0
    #allocation4 [shape = 'u8[16384]{0}', space=vmem, size = 0x4000, scoped, tag = 'output window, operand 0']
    #allocation5 [shape = 's32[2]{0}', space=sflag, size = 0x8, scoped, tag = 'scoped memory for tpu_custom_call.1']
    %20 = vsyncpa [#allocation5], 0
    %s21 = scalar_lea.sflag [#allocation5], 1
    %22 = vsyncpa %s21, 0
    loop: start=0, step=1, limit=4
    $region2: #{tpu_custom_call.1} parent=1 // loop_pre_header
      _
    $region3: #{tpu_custom_call.1} parent=1 // loop_header
      %s24 = sphi 0, %s28
      %p25 = scmp.ge.s32.totalorder %s24, 4
      %s31 = sphi 0, %s43
      %s32 = sphi 0, %s39
      %s33 = sphi 0, %s31
      %s34 = sphi 0, %s32
      %s35 = sphi 0, %s33
      %s36 = sphi 0, %s34
      %s46 = sphi 0, %s48
      %s49 = sphi 0, %s46
      %s50 = sphi 0, %s49
      %s66 = sphi 0, %s50
      %s70 = sphi 0, %s70
      %s72 = sphi 0, %s70
      %s73 = sphi 0, %s72
      %s87 = sphi 0, %s73
      %s91 = sphi 0, %s91
      %s93 = sphi 0, %s91
      %s94 = sphi 0, %s93
      %s108 = sphi 0, %s94
      %s112 = sphi 0, %s112
      %s114 = sphi 0, %s112
      %s115 = sphi 0, %s114
      %s129 = sphi 0, %s115
      %s133 = sphi 0, %s133
      %s135 = sphi 0, %s133
      %s136 = sphi 0, %s135
      %s150 = sphi 0, %s136
      %s154 = sphi 0, %s154
      %s156 = sphi 0, %s154
      %s157 = sphi 0, %s156
      %s171 = sphi 0, %s157
      %s175 = sphi 0, %s175
      %s177 = sphi 0, %s175
      %s178 = sphi 0, %s177
      %s192 = sphi 0, %s178
      %s196 = sphi 0, %s196
      %s198 = sphi 0, %s196
      %s199 = sphi 0, %s198
      %s213 = sphi 0, %s199
      %s217 = sphi 0, %s217
      %s219 = sphi 0, %s217
      %s220 = sphi 0, %s219
      %s234 = sphi 0, %s220
      %s238 = sphi 0, %s238
      %s240 = sphi 0, %s238
      %s241 = sphi 0, %s240
      %s255 = sphi 0, %s241
      %s259 = sphi 0, %s259
      %s261 = sphi 0, %s259
      %s262 = sphi 0, %s261
      %s276 = sphi 0, %s262
      %s280 = sphi 0, %s280
      %s282 = sphi 0, %s280
      %s283 = sphi 0, %s282
      %s297 = sphi 0, %s283
      %s301 = sphi 0, %s301
      %s303 = sphi 0, %s301
      %s304 = sphi 0, %s303
      %s318 = sphi 0, %s304
      %s322 = sphi 0, %s322
      %s324 = sphi 0, %s322
      %s325 = sphi 0, %s324
      %s339 = sphi 0, %s325
      %s343 = sphi 0, %s343
      %s345 = sphi 0, %s343
      %s346 = sphi 0, %s345
      %s360 = sphi 0, %s346
      %s368 = sphi 0, %s370
      %s371 = sphi 0, %s368
      %s372 = sphi 0, %s371
      %s388 = sphi 0, %s372
    $region4: #{tpu_custom_call.1} parent=1 // loop_header_branch
      %27 = sbr.rel (%p25) target = $region8
    $region5: #{tpu_custom_call.1} parent=1 // loop_body
      %s29 = ssub.s32 %s24, 1
      %s30 = ssub.s32 %s24, 2
      %s37 = sadd.s32 1, %s32
      %p38 = scmp.ge.s32.totalorder %s37, 1
      %s39 = scalar_select %p38, 0, %s37
      %s40 = sadd.s32 1, %s31
      %s41 = scalar_select %p38, %s40, %s31
      %p42 = scmp.ge.s32.totalorder %s41, 2
      %s43 = scalar_select %p42, 0, %s41
      %s44 = ssub.s32 %s31, %s43
      %p45 = scmp.eq.s32.totalorder %s44, 0
      %s47 = sadd.s32 %s46, 1
      %s48 = scalar_select %p45, %s46, %s47
      %p51 = pneg %p45
      %p52 = scmp.eq.s32.totalorder %s24, 1
      %p53 = por %p51, %p52
      %p54 = scmp.ne.s32.totalorder %s46, %s49
      %p55 = scmp.eq.s32.totalorder %s24, 0
      %p56 = por %p54, %p55
      %p57 = scmp.ne.s32.totalorder %s46, %s49
      %p58 = scmp.eq.s32.totalorder %s29, 1
      %p59 = por %p57, %p58
      %p60 = scmp.ne.s32.totalorder %s49, %s50
      %p61 = scmp.eq.s32.totalorder %s29, 0
      %p62 = por %p60, %p61
      %p63 = scmp.ne.s32.totalorder %s49, %s50
      %p64 = scmp.eq.s32.totalorder %s30, 1
      %p65 = por %p63, %p64
      %p67 = scmp.ne.s32.totalorder %s50, %s66
      %p68 = scmp.eq.s32.totalorder %s30, 0
      %p69 = por %p67, %p68
      %s71 = sadd.s32 %s70, 1
      %p74 = scmp.eq.s32.totalorder %s24, 1
      %p75 = scmp.ne.s32.totalorder %s70, %s72
      %p76 = scmp.eq.s32.totalorder %s24, 0
      %p77 = por %p75, %p76
      %p78 = scmp.ne.s32.totalorder %s70, %s72
      %p79 = scmp.eq.s32.totalorder %s29, 1
      %p80 = por %p78, %p79
      %p81 = scmp.ne.s32.totalorder %s72, %s73
      %p82 = scmp.eq.s32.totalorder %s29, 0
      %p83 = por %p81, %p82
      %p84 = scmp.ne.s32.totalorder %s72, %s73
      %p85 = scmp.eq.s32.totalorder %s30, 1
      %p86 = por %p84, %p85
      %p88 = scmp.ne.s32.totalorder %s73, %s87
      %p89 = scmp.eq.s32.totalorder %s30, 0
      %p90 = por %p88, %p89
      %s92 = sadd.s32 %s91, 1
      %p95 = scmp.eq.s32.totalorder %s24, 1
      %p96 = scmp.ne.s32.totalorder %s91, %s93
      %p97 = scmp.eq.s32.totalorder %s24, 0
      %p98 = por %p96, %p97
      %p99 = scmp.ne.s32.totalorder %s91, %s93
      %p100 = scmp.eq.s32.totalorder %s29, 1
      %p101 = por %p99, %p100
      %p102 = scmp.ne.s32.totalorder %s93, %s94
      %p103 = scmp.eq.s32.totalorder %s29, 0
      %p104 = por %p102, %p103
      %p105 = scmp.ne.s32.totalorder %s93, %s94
      %p106 = scmp.eq.s32.totalorder %s30, 1
      %p107 = por %p105, %p106
      %p109 = scmp.ne.s32.totalorder %s94, %s108
      %p110 = scmp.eq.s32.totalorder %s30, 0
      %p111 = por %p109, %p110
      %s113 = sadd.s32 %s112, 1
      %p116 = scmp.eq.s32.totalorder %s24, 1
      %p117 = scmp.ne.s32.totalorder %s112, %s114
      %p118 = scmp.eq.s32.totalorder %s24, 0
      %p119 = por %p117, %p118
      %p120 = scmp.ne.s32.totalorder %s112, %s114
      %p121 = scmp.eq.s32.totalorder %s29, 1
      %p122 = por %p120, %p121
      %p123 = scmp.ne.s32.totalorder %s114, %s115
      %p124 = scmp.eq.s32.totalorder %s29, 0
      %p125 = por %p123, %p124
      %p126 = scmp.ne.s32.totalorder %s114, %s115
      %p127 = scmp.eq.s32.totalorder %s30, 1
      %p128 = por %p126, %p127
      %p130 = scmp.ne.s32.totalorder %s115, %s129
      %p131 = scmp.eq.s32.totalorder %s30, 0
      %p132 = por %p130, %p131
      %s134 = sadd.s32 %s133, 1
      %p137 = scmp.eq.s32.totalorder %s24, 1
      %p138 = scmp.ne.s32.totalorder %s133, %s135
      %p139 = scmp.eq.s32.totalorder %s24, 0
      %p140 = por %p138, %p139
      %p141 = scmp.ne.s32.totalorder %s133, %s135
      %p142 = scmp.eq.s32.totalorder %s29, 1
      %p143 = por %p141, %p142
      %p144 = scmp.ne.s32.totalorder %s135, %s136
      %p145 = scmp.eq.s32.totalorder %s29, 0
      %p146 = por %p144, %p145
      %p147 = scmp.ne.s32.totalorder %s135, %s136
      %p148 = scmp.eq.s32.totalorder %s30, 1
      %p149 = por %p147, %p148
      %p151 = scmp.ne.s32.totalorder %s136, %s150
      %p152 = scmp.eq.s32.totalorder %s30, 0
      %p153 = por %p151, %p152
      %s155 = sadd.s32 %s154, 1
      %p158 = scmp.eq.s32.totalorder %s24, 1
      %p159 = scmp.ne.s32.totalorder %s154, %s156
      %p160 = scmp.eq.s32.totalorder %s24, 0
      %p161 = por %p159, %p160
      %p162 = scmp.ne.s32.totalorder %s154, %s156
      %p163 = scmp.eq.s32.totalorder %s29, 1
      %p164 = por %p162, %p163
      %p165 = scmp.ne.s32.totalorder %s156, %s157
      %p166 = scmp.eq.s32.totalorder %s29, 0
      %p167 = por %p165, %p166
      %p168 = scmp.ne.s32.totalorder %s156, %s157
      %p169 = scmp.eq.s32.totalorder %s30, 1
      %p170 = por %p168, %p169
      %p172 = scmp.ne.s32.totalorder %s157, %s171
      %p173 = scmp.eq.s32.totalorder %s30, 0
      %p174 = por %p172, %p173
      %s176 = sadd.s32 %s175, 1
      %p179 = scmp.eq.s32.totalorder %s24, 1
      %p180 = scmp.ne.s32.totalorder %s175, %s177
      %p181 = scmp.eq.s32.totalorder %s24, 0
      %p182 = por %p180, %p181
      %p183 = scmp.ne.s32.totalorder %s175, %s177
      %p184 = scmp.eq.s32.totalorder %s29, 1
      %p185 = por %p183, %p184
      %p186 = scmp.ne.s32.totalorder %s177, %s178
      %p187 = scmp.eq.s32.totalorder %s29, 0
      %p188 = por %p186, %p187
      %p189 = scmp.ne.s32.totalorder %s177, %s178
      %p190 = scmp.eq.s32.totalorder %s30, 1
      %p191 = por %p189, %p190
      %p193 = scmp.ne.s32.totalorder %s178, %s192
      %p194 = scmp.eq.s32.totalorder %s30, 0
      %p195 = por %p193, %p194
      %s197 = sadd.s32 %s196, 1
      %p200 = scmp.eq.s32.totalorder %s24, 1
      %p201 = scmp.ne.s32.totalorder %s196, %s198
      %p202 = scmp.eq.s32.totalorder %s24, 0
      %p203 = por %p201, %p202
      %p204 = scmp.ne.s32.totalorder %s196, %s198
      %p205 = scmp.eq.s32.totalorder %s29, 1
      %p206 = por %p204, %p205
      %p207 = scmp.ne.s32.totalorder %s198, %s199
      %p208 = scmp.eq.s32.totalorder %s29, 0
      %p209 = por %p207, %p208
      %p210 = scmp.ne.s32.totalorder %s198, %s199
      %p211 = scmp.eq.s32.totalorder %s30, 1
      %p212 = por %p210, %p211
      %p214 = scmp.ne.s32.totalorder %s199, %s213
      %p215 = scmp.eq.s32.totalorder %s30, 0
      %p216 = por %p214, %p215
      %s218 = sadd.s32 %s217, 1
      %p221 = scmp.eq.s32.totalorder %s24, 1
      %p222 = scmp.ne.s32.totalorder %s217, %s219
      %p223 = scmp.eq.s32.totalorder %s24, 0
      %p224 = por %p222, %p223
      %p225 = scmp.ne.s32.totalorder %s217, %s219
      %p226 = scmp.eq.s32.totalorder %s29, 1
      %p227 = por %p225, %p226
      %p228 = scmp.ne.s32.totalorder %s219, %s220
      %p229 = scmp.eq.s32.totalorder %s29, 0
      %p230 = por %p228, %p229
      %p231 = scmp.ne.s32.totalorder %s219, %s220
      %p232 = scmp.eq.s32.totalorder %s30, 1
      %p233 = por %p231, %p232
      %p235 = scmp.ne.s32.totalorder %s220, %s234
      %p236 = scmp.eq.s32.totalorder %s30, 0
      %p237 = por %p235, %p236
      %s239 = sadd.s32 %s238, 1
      %p242 = scmp.eq.s32.totalorder %s24, 1
      %p243 = scmp.ne.s32.totalorder %s238, %s240
      %p244 = scmp.eq.s32.totalorder %s24, 0
      %p245 = por %p243, %p244
      %p246 = scmp.ne.s32.totalorder %s238, %s240
      %p247 = scmp.eq.s32.totalorder %s29, 1
      %p248 = por %p246, %p247
      %p249 = scmp.ne.s32.totalorder %s240, %s241
      %p250 = scmp.eq.s32.totalorder %s29, 0
      %p251 = por %p249, %p250
      %p252 = scmp.ne.s32.totalorder %s240, %s241
      %p253 = scmp.eq.s32.totalorder %s30, 1
      %p254 = por %p252, %p253
      %p256 = scmp.ne.s32.totalorder %s241, %s255
      %p257 = scmp.eq.s32.totalorder %s30, 0
      %p258 = por %p256, %p257
      %s260 = sadd.s32 %s259, 1
      %p263 = scmp.eq.s32.totalorder %s24, 1
      %p264 = scmp.ne.s32.totalorder %s259, %s261
      %p265 = scmp.eq.s32.totalorder %s24, 0
      %p266 = por %p264, %p265
      %p267 = scmp.ne.s32.totalorder %s259, %s261
      %p268 = scmp.eq.s32.totalorder %s29, 1
      %p269 = por %p267, %p268
      %p270 = scmp.ne.s32.totalorder %s261, %s262
      %p271 = scmp.eq.s32.totalorder %s29, 0
      %p272 = por %p270, %p271
      %p273 = scmp.ne.s32.totalorder %s261, %s262
      %p274 = scmp.eq.s32.totalorder %s30, 1
      %p275 = por %p273, %p274
      %p277 = scmp.ne.s32.totalorder %s262, %s276
      %p278 = scmp.eq.s32.totalorder %s30, 0
      %p279 = por %p277, %p278
      %s281 = sadd.s32 %s280, 1
      %p284 = scmp.eq.s32.totalorder %s24, 1
      %p285 = scmp.ne.s32.totalorder %s280, %s282
      %p286 = scmp.eq.s32.totalorder %s24, 0
      %p287 = por %p285, %p286
      %p288 = scmp.ne.s32.totalorder %s280, %s282
      %p289 = scmp.eq.s32.totalorder %s29, 1
      %p290 = por %p288, %p289
      %p291 = scmp.ne.s32.totalorder %s282, %s283
      %p292 = scmp.eq.s32.totalorder %s29, 0
      %p293 = por %p291, %p292
      %p294 = scmp.ne.s32.totalorder %s282, %s283
      %p295 = scmp.eq.s32.totalorder %s30, 1
      %p296 = por %p294, %p295
      %p298 = scmp.ne.s32.totalorder %s283, %s297
      %p299 = scmp.eq.s32.totalorder %s30, 0
      %p300 = por %p298, %p299
      %s302 = sadd.s32 %s301, 1
      %p305 = scmp.eq.s32.totalorder %s24, 1
      %p306 = scmp.ne.s32.totalorder %s301, %s303
      %p307 = scmp.eq.s32.totalorder %s24, 0
      %p308 = por %p306, %p307
      %p309 = scmp.ne.s32.totalorder %s301, %s303
      %p310 = scmp.eq.s32.totalorder %s29, 1
      %p311 = por %p309, %p310
      %p312 = scmp.ne.s32.totalorder %s303, %s304
      %p313 = scmp.eq.s32.totalorder %s29, 0
      %p314 = por %p312, %p313
      %p315 = scmp.ne.s32.totalorder %s303, %s304
      %p316 = scmp.eq.s32.totalorder %s30, 1
      %p317 = por %p315, %p316
      %p319 = scmp.ne.s32.totalorder %s304, %s318
      %p320 = scmp.eq.s32.totalorder %s30, 0
      %p321 = por %p319, %p320
      %s323 = sadd.s32 %s322, 1
      %p326 = scmp.eq.s32.totalorder %s24, 1
      %p327 = scmp.ne.s32.totalorder %s322, %s324
      %p328 = scmp.eq.s32.totalorder %s24, 0
      %p329 = por %p327, %p328
      %p330 = scmp.ne.s32.totalorder %s322, %s324
      %p331 = scmp.eq.s32.totalorder %s29, 1
      %p332 = por %p330, %p331
      %p333 = scmp.ne.s32.totalorder %s324, %s325
      %p334 = scmp.eq.s32.totalorder %s29, 0
      %p335 = por %p333, %p334
      %p336 = scmp.ne.s32.totalorder %s324, %s325
      %p337 = scmp.eq.s32.totalorder %s30, 1
      %p338 = por %p336, %p337
      %p340 = scmp.ne.s32.totalorder %s325, %s339
      %p341 = scmp.eq.s32.totalorder %s30, 0
      %p342 = por %p340, %p341
      %s344 = sadd.s32 %s343, 1
      %p347 = scmp.eq.s32.totalorder %s24, 1
      %p348 = scmp.ne.s32.totalorder %s343, %s345
      %p349 = scmp.eq.s32.totalorder %s24, 0
      %p350 = por %p348, %p349
      %p351 = scmp.ne.s32.totalorder %s343, %s345
      %p352 = scmp.eq.s32.totalorder %s29, 1
      %p353 = por %p351, %p352
      %p354 = scmp.ne.s32.totalorder %s345, %s346
      %p355 = scmp.eq.s32.totalorder %s29, 0
      %p356 = por %p354, %p355
      %p357 = scmp.ne.s32.totalorder %s345, %s346
      %p358 = scmp.eq.s32.totalorder %s30, 1
      %p359 = por %p357, %p358
      %p361 = scmp.ne.s32.totalorder %s346, %s360
      %p362 = scmp.eq.s32.totalorder %s30, 0
      %p363 = por %p361, %p362
      %s364 = ssub.s32 %s31, %s43
      %s365 = ssub.s32 %s32, %s39
      %s366 = sor.u32 %s364, %s365
      %p367 = scmp.eq.s32.totalorder %s366, 0
      %s369 = sadd.s32 %s368, 1
      %s370 = scalar_select %p367, %s368, %s369
      %p373 = pneg %p367
      %p374 = scmp.eq.s32.totalorder %s24, 1
      %p375 = por %p373, %p374
      %p376 = scmp.ne.s32.totalorder %s368, %s371
      %p377 = scmp.eq.s32.totalorder %s24, 0
      %p378 = por %p376, %p377
      %p379 = scmp.ne.s32.totalorder %s368, %s371
      %p380 = scmp.eq.s32.totalorder %s29, 1
      %p381 = por %p379, %p380
      %p382 = scmp.ne.s32.totalorder %s371, %s372
      %p383 = scmp.eq.s32.totalorder %s29, 0
      %p384 = por %p382, %p383
      %p385 = scmp.ne.s32.totalorder %s371, %s372
      %p386 = scmp.eq.s32.totalorder %s30, 1
      %p387 = por %p385, %p386
      %p389 = scmp.ne.s32.totalorder %s372, %s388
      %p390 = scmp.eq.s32.totalorder %s30, 0
      %p391 = por %p389, %p390
      %p392 = scmp.le.s32.totalorder 1, %s24
      %p393 = scmp.lt.s32.totalorder %s24, 3
      %p394 = pnand %p392, %p393
      %p395 = pneg %p394
      // Predicated region
      $region9: #{tpu_custom_call.1} parent=5 // pred_check
        _
      $region10: #{tpu_custom_call.1} parent=5 // pred_check_branch
        %397 = sbr.rel (%p394) target = $region12
      $region11: #{tpu_custom_call.1} parent=5 // pred_region
        %s398 = ssub.s32 %s24, 1
        // Predicated region
        $region13: #{tpu_custom_call.1} parent=11 // pred_check
          %p399 = pneg %p83
        $region14: #{tpu_custom_call.1} parent=11 // pred_check_branch
          %401 = sbr.rel (%p399) target = $region16
        $region15: #{tpu_custom_call.1} parent=11 // pred_region
          _
        $region16: #{tpu_custom_call.1} parent=11 // pred_fallthru
          _
        // Predicated region
        $region17: #{tpu_custom_call.1} parent=11 // pred_check
          %p402 = pneg %p104
        $region18: #{tpu_custom_call.1} parent=11 // pred_check_branch
          %404 = sbr.rel (%p402) target = $region20
        $region19: #{tpu_custom_call.1} parent=11 // pred_region
          _
        $region20: #{tpu_custom_call.1} parent=11 // pred_fallthru
          _
        // Predicated region
        $region21: #{tpu_custom_call.1} parent=11 // pred_check
          %p405 = pneg %p125
        $region22: #{tpu_custom_call.1} parent=11 // pred_check_branch
          %407 = sbr.rel (%p405) target = $region24
        $region23: #{tpu_custom_call.1} parent=11 // pred_region
          _
        $region24: #{tpu_custom_call.1} parent=11 // pred_fallthru
          _
        // Predicated region
        $region25: #{tpu_custom_call.1} parent=11 // pred_check
          %p408 = pneg %p146
        $region26: #{tpu_custom_call.1} parent=11 // pred_check_branch
          %410 = sbr.rel (%p408) target = $region28
        $region27: #{tpu_custom_call.1} parent=11 // pred_region
          _
        $region28: #{tpu_custom_call.1} parent=11 // pred_fallthru
          _
        // Predicated region
        $region29: #{tpu_custom_call.1} parent=11 // pred_check
          %p411 = pneg %p167
        $region30: #{tpu_custom_call.1} parent=11 // pred_check_branch
          %413 = sbr.rel (%p411) target = $region32
        $region31: #{tpu_custom_call.1} parent=11 // pred_region
          _
        $region32: #{tpu_custom_call.1} parent=11 // pred_fallthru
          _
        // Predicated region
        $region33: #{tpu_custom_call.1} parent=11 // pred_check
          %p414 = pneg %p188
        $region34: #{tpu_custom_call.1} parent=11 // pred_check_branch
          %416 = sbr.rel (%p414) target = $region36
        $region35: #{tpu_custom_call.1} parent=11 // pred_region
          _
        $region36: #{tpu_custom_call.1} parent=11 // pred_fallthru
          _
        // Predicated region
        $region37: #{tpu_custom_call.1} parent=11 // pred_check
          %p417 = pneg %p209
        $region38: #{tpu_custom_call.1} parent=11 // pred_check_branch
          %419 = sbr.rel (%p417) target = $region40
        $region39: #{tpu_custom_call.1} parent=11 // pred_region
          _
        $region40: #{tpu_custom_call.1} parent=11 // pred_fallthru
          _
        // Predicated region
        $region41: #{tpu_custom_call.1} parent=11 // pred_check
          %p420 = pneg %p230
        $region42: #{tpu_custom_call.1} parent=11 // pred_check_branch
          %422 = sbr.rel (%p420) target = $region44
        $region43: #{tpu_custom_call.1} parent=11 // pred_region
          _
        $region44: #{tpu_custom_call.1} parent=11 // pred_fallthru
          _
        // Predicated region
        $region45: #{tpu_custom_call.1} parent=11 // pred_check
          %p423 = pneg %p251
        $region46: #{tpu_custom_call.1} parent=11 // pred_check_branch
          %425 = sbr.rel (%p423) target = $region48
        $region47: #{tpu_custom_call.1} parent=11 // pred_region
          _
        $region48: #{tpu_custom_call.1} parent=11 // pred_fallthru
          _
        // Predicated region
        $region49: #{tpu_custom_call.1} parent=11 // pred_check
          %p426 = pneg %p272
        $region50: #{tpu_custom_call.1} parent=11 // pred_check_branch
          %428 = sbr.rel (%p426) target = $region52
        $region51: #{tpu_custom_call.1} parent=11 // pred_region
          _
        $region52: #{tpu_custom_call.1} parent=11 // pred_fallthru
          _
        // Predicated region
        $region53: #{tpu_custom_call.1} parent=11 // pred_check
          %p429 = pneg %p293
        $region54: #{tpu_custom_call.1} parent=11 // pred_check_branch
          %431 = sbr.rel (%p429) target = $region56
        $region55: #{tpu_custom_call.1} parent=11 // pred_region
          _
        $region56: #{tpu_custom_call.1} parent=11 // pred_fallthru
          _
        // Predicated region
        $region57: #{tpu_custom_call.1} parent=11 // pred_check
          %p432 = pneg %p314
        $region58: #{tpu_custom_call.1} parent=11 // pred_check_branch
          %434 = sbr.rel (%p432) target = $region60
        $region59: #{tpu_custom_call.1} parent=11 // pred_region
          _
        $region60: #{tpu_custom_call.1} parent=11 // pred_fallthru
          _
        // Predicated region
        $region61: #{tpu_custom_call.1} parent=11 // pred_check
          %p435 = pneg %p335
        $region62: #{tpu_custom_call.1} parent=11 // pred_check_branch
          %437 = sbr.rel (%p435) target = $region64
        $region63: #{tpu_custom_call.1} parent=11 // pred_region
          _
        $region64: #{tpu_custom_call.1} parent=11 // pred_fallthru
          _
        // Predicated region
        $region65: #{tpu_custom_call.1} parent=11 // pred_check
          %p438 = pneg %p356
        $region66: #{tpu_custom_call.1} parent=11 // pred_check_branch
          %440 = sbr.rel (%p438) target = $region68
        $region67: #{tpu_custom_call.1} parent=11 // pred_region
          _
        $region68: #{tpu_custom_call.1} parent=11 // pred_fallthru
          _
      $region12: #{tpu_custom_call.1} parent=5 // pred_fallthru
        _
      %p441 = scmp.lt.s32.totalorder %s24, 2
      // Predicated region
      $region69: #{tpu_custom_call.1} parent=5 // pred_check
        %p442 = pneg %p441
      $region70: #{tpu_custom_call.1} parent=5 // pred_check_branch
        %444 = sbr.rel (%p442) target = $region72
      $region71: #{tpu_custom_call.1} parent=5 // pred_region
        // Predicated region
        $region73: #{tpu_custom_call.1} parent=71 // pred_check
          %p445 = pneg %p56
        $region74: #{tpu_custom_call.1} parent=71 // pred_check_branch
          %447 = sbr.rel (%p445) target = $region76
        $region75: #{tpu_custom_call.1} parent=71 // pred_region
          %p448 = scmp.lt.s32.totalorder %s31, 1
          %s449 = scalar_select %p448, %s31, 1
          %s450 = smul.addr %s449, 2
          %s451 = smul.addr %s450, 8
          %s452 = scalar_lea.vmem %s0, %s451
        $region76: #{tpu_custom_call.1} parent=71 // pred_fallthru
          _
      $region72: #{tpu_custom_call.1} parent=5 // pred_fallthru
        _
      %p453 = scmp.le.s32.totalorder 1, %s24
      %p454 = scmp.lt.s32.totalorder %s24, 3
      %p455 = pnand %p453, %p454
      %p456 = pneg %p455
      // Predicated region
      $region77: #{tpu_custom_call.1} parent=5 // pred_check
        _
      $region78: #{tpu_custom_call.1} parent=5 // pred_check_branch
        %458 = sbr.rel (%p455) target = $region80
      $region79: #{tpu_custom_call.1} parent=5 // pred_region
        %s459 = ssub.s32 %s24, 1
        %p460 = scmp.lt.s32.totalorder %s33, 1
        %s461 = scalar_select %p460, %s33, 1
        %s462 = smul.addr %s461, 2
        %s463 = smul.addr %s462, 8
        %s464 = scalar_lea.vmem %s0, %s463
        %p465 = pneg %p62
        %p466 = pneg %p59
        %p467 = pneg %p83
        %p468 = pneg %p80
        %p469 = pneg %p104
        %p470 = pneg %p101
        %p471 = pneg %p125
        %p472 = pneg %p122
        %p473 = pneg %p146
        %p474 = pneg %p143
        %p475 = pneg %p167
        %p476 = pneg %p164
        %p477 = pneg %p188
        %p478 = pneg %p185
        %p479 = pneg %p209
        %p480 = pneg %p206
        %p481 = pneg %p230
        %p482 = pneg %p227
        %p483 = pneg %p251
        %p484 = pneg %p248
        %p485 = pneg %p272
        %p486 = pneg %p269
        %p487 = pneg %p293
        %p488 = pneg %p290
        %p489 = pneg %p314
        %p490 = pneg %p311
        %p491 = pneg %p335
        %p492 = pneg %p332
        %p493 = pneg %p356
        %p494 = pneg %p353
        %p495 = pneg %p384
        %p496 = pneg %p381
        %s497 = sand.u32 %s371, 1
        %s498 = scalar_lea.sflag [#allocation5], %s497
        %s499 = sand.u32 %s371, 1
        %s500 = smul.addr %s499, 16
        %s501 = scalar_lea.vmem [#allocation4], %s500
        %p502 = scmp.lt.s32.totalorder %s33, 1
        %s503 = scalar_select %p502, %s33, 1
        %s504 = smul.addr %s503, 2
        %s505 = smul.addr %s504, 8
        %s506 = scalar_lea.vmem %s0, %s505
        %s507 = smul.u32 2, %s34
        %p509 = scmp.eq.s32.totalorder %s34, 0
        // Predicated region
        $region81: #{tpu_custom_call.1} parent=79 // pred_check
          %p510 = pneg %p509
        $region82: #{tpu_custom_call.1} parent=79 // pred_check_branch
          %512 = sbr.rel (%p510) target = $region84
        $region83: #{tpu_custom_call.1} parent=79 // pred_region
          %v513 = vld [vmem:[%s506] sm:$0xff]
          %v514 = vld [vmem:[%s506 + $0x8] sm:$0xff]
          %vm515 = vcmask 523264
          %v516 = vsel %vm515, %v513, 0.0
          %517 = vadd.xlane.f32.xlu0 %v516
          %v518 = vpop.xlane.xlu0 %517
          %v519 = vsel %vm515, %v514, 0.0
          %520 = vadd.xlane.f32.xlu0 %v519
          %v521 = vpop.xlane.xlu0 %520
          %v522 = vrcp.pop 64.0
          %v523 = vmul.f32 %v518, %v522
          %v524 = vmul.f32 %v521, %v522
          %v525 = vsub.f32 %v513, %v523
          %v526 = vsub.f32 %v514, %v524
          %v527 = vmul.f32 %v525, %v525
          %v528 = vmul.f32 %v526, %v526
          %v529 = vsel %vm515, %v527, 0.0
          %530 = vadd.xlane.f32.xlu0 %v529
          %v531 = vpop.xlane.xlu0 %530
          %v532 = vsel %vm515, %v528, 0.0
          %533 = vadd.xlane.f32.xlu0 %v532
          %v534 = vpop.xlane.xlu0 %533
          %v535 = vmul.f32 %v531, %v522
          %v536 = vmul.f32 %v534, %v522
          %v537 = vadd.f32 %v535, 1e-05
          %v538 = vadd.f32 %v536, 1e-05
          %v539 = vrsqrt.pop %v537
          %v540 = vrsqrt.pop %v538
          %v541 = vmul.f32 %v525, %v539
          %v542 = vmul.f32 %v526, %v540
          %v543 = vld [vmem:[%s1] sm:$0x1]
          %v545 = vlaneseq
          %v546 = vshrl.u32 %v545, 7
          %v547 = vsub.s32 0, %v546
          %v548 = vrot.slane %v543, %v547
          %v550 = vmul.f32 %v541, %v548
          %v551 = vmul.f32 %v542, %v548
          %v552 = vld [vmem:[%s2] sm:$0x1]
          %v554 = vlaneseq
          %v555 = vshrl.u32 %v554, 7
          %v556 = vsub.s32 0, %v555
          %v557 = vrot.slane %v552, %v556
          %v559 = vadd.f32 %v550, %v557
          %v560 = vadd.f32 %v551, %v557
          %v561 = vpack.c.bf16 %v560, %v559
          %v562 = vld [vmem:[%s3] sm:$0xf]
          %v563 = vld [vmem:[%s3 + $0x4] sm:$0xf]
          %v564 = vld [vmem:[%s3 + $0x8] sm:$0xf]
          %v565 = vld [vmem:[%s3 + $0xc] sm:$0xf]
          %v566 = vld [vmem:[%s3 + $0x10] sm:$0xf]
          %v567 = vld [vmem:[%s3 + $0x14] sm:$0xf]
          %v568 = vld [vmem:[%s3 + $0x18] sm:$0xf]
          %v569 = vld [vmem:[%s3 + $0x1c] sm:$0xf]
          %v578 = vunpack.c.l.b16 %v562
          %v579 = vunpack.c.l.b16 %v563
          %v580 = vunpack.c.l.b16 %v564
          %v581 = vunpack.c.l.b16 %v565
          %v582 = vunpack.c.l.b16 %v566
          %v583 = vunpack.c.l.b16 %v567
          %v584 = vunpack.c.l.b16 %v568
          %v585 = vunpack.c.l.b16 %v569
          %v586 = vpack.c.b16 %v579, %v578
          %v587 = vpack.c.b16 %v581, %v580
          %v588 = vpack.c.b16 %v583, %v582
          %v589 = vpack.c.b16 %v585, %v584
          %v595 = vsel %vm515, %v561, 0
          %597 = vmatprep.subr.bf16.mxu0 0
          %598 = vmatpush1.bf16.msra.mxu0 %v586
          %599 = vmatprep.subr.bf16.mxu0 0
          %600 = vmatpush1.bf16.msra.mxu0 %v587
          %601 = vmatprep.subr.bf16.mxu0 0
          %602 = vmatpush1.bf16.msra.mxu0 %v588
          %603 = vmatprep.subr.bf16.mxu0 0
          %604 = vmatpush1.bf16.msra.mxu0 %v589
          %605 = vmatprep.subr.bf16.mxu0 0
          %606 = vmatpush1.bf16.msra.mxu0 0
          %607 = vmatprep.subr.bf16.mxu0 0
          %608 = vmatpush1.bf16.msra.mxu0 0
          %609 = vmatprep.subr.bf16.mxu0 0
          %610 = vmatpush1.bf16.msra.mxu0 0
          %611 = vmatprep.subr.bf16.mxu0 0
          %612 = vmatpush1.bf16.msra.mxu0 0
          %613 = vmatprep.subr.bf16.mxu0 0
          %614 = vmatpush1.bf16.msra.mxu0 0
          %615 = vmatprep.subr.bf16.mxu0 0
          %616 = vmatpush1.bf16.msra.mxu0 0
          %617 = vmatprep.subr.bf16.mxu0 0
          %618 = vmatpush1.bf16.msra.mxu0 0
          %619 = vmatprep.subr.bf16.mxu0 0
          %620 = vmatpush1.bf16.msra.mxu0 0
          %621 = vmatprep.subr.bf16.mxu0 0
          %622 = vmatpush1.bf16.msra.mxu0 0
          %623 = vmatprep.subr.bf16.mxu0 0
          %624 = vmatpush1.bf16.msra.mxu0 0
          %625 = vmatprep.subr.bf16.mxu0 0
          %626 = vmatpush1.bf16.msra.mxu0 0
          %627 = vmatprep.subr.bf16.mxu0 0
          %628 = vmatpush1.bf16.msra.mxu0 0
          %629 = vmatprep.mubr.bf16.mxu0 0
          %630 = vmatmul.mubr.bf16.gmra.mrb[0].mxu0 %v595
          %v631 = vpop.f32.mrb[0].mxu0
          %v632 = vadd.f32 0.0, %v631
          %v633 = vpop.f32.mrb[0].mxu0
          %v634 = vpop.f32.mrb[0].mxu0
          %v635 = vadd.f32 0.0, %v634
          %v636 = vpop.f32.mrb[0].mxu0
          %637 = vdwg.mxu0
          %v638 = vpack.c.bf16 %v635, %v632
          %639 = vst.msk [vmem:[#allocation2] sm:$0xff] %vm515, %v638
          %v640 = vld [vmem:[%s4] sm:$0xf]
          %v641 = vld [vmem:[%s4 + $0x4] sm:$0xf]
          %v642 = vld [vmem:[%s4 + $0x8] sm:$0xf]
          %v643 = vld [vmem:[%s4 + $0xc] sm:$0xf]
          %v644 = vld [vmem:[%s4 + $0x10] sm:$0xf]
          %v645 = vld [vmem:[%s4 + $0x14] sm:$0xf]
          %v646 = vld [vmem:[%s4 + $0x18] sm:$0xf]
          %v647 = vld [vmem:[%s4 + $0x1c] sm:$0xf]
          %v656 = vunpack.c.l.b16 %v640
          %v657 = vunpack.c.l.b16 %v641
          %v658 = vunpack.c.l.b16 %v642
          %v659 = vunpack.c.l.b16 %v643
          %v660 = vunpack.c.l.b16 %v644
          %v661 = vunpack.c.l.b16 %v645
          %v662 = vunpack.c.l.b16 %v646
          %v663 = vunpack.c.l.b16 %v647
          %v664 = vpack.c.b16 %v657, %v656
          %v665 = vpack.c.b16 %v659, %v658
          %v666 = vpack.c.b16 %v661, %v660
          %v667 = vpack.c.b16 %v663, %v662
          %672 = vmatprep.subr.bf16.mxu0 0
          %673 = vmatpush1.bf16.msra.mxu0 %v664
          %674 = vmatprep.subr.bf16.mxu0 0
          %675 = vmatpush1.bf16.msra.mxu0 %v665
          %676 = vmatprep.subr.bf16.mxu0 0
          %677 = vmatpush1.bf16.msra.mxu0 %v666
          %678 = vmatprep.subr.bf16.mxu0 0
          %679 = vmatpush1.bf16.msra.mxu0 %v667
          %680 = vmatprep.subr.bf16.mxu0 0
          %681 = vmatpush1.bf16.msra.mxu0 0
          %682 = vmatprep.subr.bf16.mxu0 0
          %683 = vmatpush1.bf16.msra.mxu0 0
          %684 = vmatprep.subr.bf16.mxu0 0
          %685 = vmatpush1.bf16.msra.mxu0 0
          %686 = vmatprep.subr.bf16.mxu0 0
          %687 = vmatpush1.bf16.msra.mxu0 0
          %688 = vmatprep.subr.bf16.mxu0 0
          %689 = vmatpush1.bf16.msra.mxu0 0
          %690 = vmatprep.subr.bf16.mxu0 0
          %691 = vmatpush1.bf16.msra.mxu0 0
          %692 = vmatprep.subr.bf16.mxu0 0
          %693 = vmatpush1.bf16.msra.mxu0 0
          %694 = vmatprep.subr.bf16.mxu0 0
          %695 = vmatpush1.bf16.msra.mxu0 0
          %696 = vmatprep.subr.bf16.mxu0 0
          %697 = vmatpush1.bf16.msra.mxu0 0
          %698 = vmatprep.subr.bf16.mxu0 0
          %699 = vmatpush1.bf16.msra.mxu0 0
          %700 = vmatprep.subr.bf16.mxu0 0
          %701 = vmatpush1.bf16.msra.mxu0 0
          %702 = vmatprep.subr.bf16.mxu0 0
          %703 = vmatpush1.bf16.msra.mxu0 0
          %704 = vmatprep.mubr.bf16.mxu0 0
          %705 = vmatmul.mubr.bf16.gmra.mrb[0].mxu0 %v595
          %v706 = vpop.f32.mrb[0].mxu0
          %v707 = vadd.f32 0.0, %v706
          %v708 = vpop.f32.mrb[0].mxu0
          %v709 = vpop.f32.mrb[0].mxu0
          %v710 = vadd.f32 0.0, %v709
          %v711 = vpop.f32.mrb[0].mxu0
          %712 = vdwg.mxu0
          %v713 = vpack.c.bf16 %v710, %v707
          %714 = vst [vmem:[#allocation3] sm:$0xff] %v713
        $region84: #{tpu_custom_call.1} parent=79 // pred_fallthru
          _
        %s715 = smul.u32 %s34, 16
        %s716 = scalar_lea.vmem %s506, %s715
        %v717 = vld [vmem:[%s716] sm:$0xff]
        %v718 = vld [vmem:[%s716 + $0x8] sm:$0xff]
        %s719 = sshra.s32 %s715, 4
        %s720 = sand.u32 %s715, 15
        %s721 = smul.addr %s719, 8
        %s722 = scalar_lea.vmem [#allocation2], %s721
        %v723 = vld [vmem:[%s722] sm:$0xff]
        %v724 = vld [vmem:[#allocation3] sm:$0xff]
        %vm725 = vcmask 130048
        %v727 = vsel %vm725, %v723, 0
        %v730 = vsel %vm725, %v724, 0
        %732 = vmatprep.subr.bf16.mxu0 0
        %733 = vmatpush1.bf16.xpose.msra.mxu0 %v730
        %734 = vmatprep.subr.bf16.mxu0 0
        %735 = vmatpush1.bf16.xpose.msra.mxu0 0
        %736 = vmatprep.subr.bf16.mxu0 0
        %737 = vmatpush1.bf16.xpose.msra.mxu0 0
        %738 = vmatprep.subr.bf16.mxu0 0
        %739 = vmatpush1.bf16.xpose.msra.mxu0 0
        %740 = vmatprep.subr.bf16.mxu0 0
        %741 = vmatpush1.bf16.xpose.msra.mxu0 0
        %742 = vmatprep.subr.bf16.mxu0 0
        %743 = vmatpush1.bf16.xpose.msra.mxu0 0
        %744 = vmatprep.subr.bf16.mxu0 0
        %745 = vmatpush1.bf16.xpose.msra.mxu0 0
        %746 = vmatprep.subr.bf16.mxu0 0
        %747 = vmatpush1.bf16.xpose.msra.mxu0 0
        %748 = vmatprep.subr.bf16.mxu0 0
        %749 = vmatpush1.bf16.xpose.msra.mxu0 0
        %750 = vmatprep.subr.bf16.mxu0 0
        %751 = vmatpush1.bf16.xpose.msra.mxu0 0
        %752 = vmatprep.subr.bf16.mxu0 0
        %753 = vmatpush1.bf16.xpose.msra.mxu0 0
        %754 = vmatprep.subr.bf16.mxu0 0
        %755 = vmatpush1.bf16.xpose.msra.mxu0 0
        %756 = vmatprep.subr.bf16.mxu0 0
        %757 = vmatpush1.bf16.xpose.msra.mxu0 0
        %758 = vmatprep.subr.bf16.mxu0 0
        %759 = vmatpush1.bf16.xpose.msra.mxu0 0
        %760 = vmatprep.subr.bf16.mxu0 0
        %761 = vmatpush1.bf16.xpose.msra.mxu0 0
        %762 = vmatprep.subr.bf16.mxu0 0
        %763 = vmatpush1.bf16.xpose.msra.mxu0 0
        %764 = vmatprep.mubr.bf16.mxu0 0
        %765 = vmatmul.mubr.bf16.gmra.mrb[0].mxu0 %v727
        %v766 = vpop.f32.mrb[0].mxu0
        %v767 = vadd.f32 0.0, %v766
        %v768 = vpop.f32.mrb[0].mxu0
        %v769 = vpop.f32.mrb[0].mxu0
        %v770 = vadd.f32 0.0, %v769
        %v771 = vpop.f32.mrb[0].mxu0
        %772 = vdwg.mxu0
        %v773 = vsel %vm725, %v767, -inf
        %774 = vmax.xlane.f32.xlu0 %v773
        %v775 = vpop.xlane.xlu0 %774
        %v776 = vsel %vm725, %v770, -inf
        %777 = vmax.xlane.f32.xlu0 %v776
        %v778 = vpop.xlane.xlu0 %777
        %v779 = vsub.f32 %v767, %v775
        %v780 = vsub.f32 %v770, %v778
        %v781 = vmul.f32 %v779, 1.442695
        %v782 = vpow.pop %v781
        %v783 = vmul.f32 %v780, 1.442695
        %v784 = vpow.pop %v783
        %v785 = vsel %vm725, %v782, 0.0
        %786 = vadd.xlane.f32.xlu0 %v785
        %v787 = vpop.xlane.xlu0 %786
        %v788 = vsel %vm725, %v784, 0.0
        %789 = vadd.xlane.f32.xlu0 %v788
        %v790 = vpop.xlane.xlu0 %789
        %v791 = vrcp.pop %v787
        %v792 = vrcp.pop %v790
        %v793 = vpack.c.bf16 %v784, %v782
        %795 = vrot.lane.b32.xlu0 %v724, 64
        %v796 = vpop.permute.xlu0 %795
        %v799 = vsel %vm725, %v793, 0
        %801 = vmatprep.subr.bf16.mxu0 0
        %802 = vmatpush1.bf16.msra.mxu0 %v796
        %803 = vmatprep.subr.bf16.mxu0 0
        %804 = vmatpush1.bf16.msra.mxu0 0
        %805 = vmatprep.subr.bf16.mxu0 0
        %806 = vmatpush1.bf16.msra.mxu0 0
        %807 = vmatprep.subr.bf16.mxu0 0
        %808 = vmatpush1.bf16.msra.mxu0 0
        %809 = vmatprep.subr.bf16.mxu0 0
        %810 = vmatpush1.bf16.msra.mxu0 0
        %811 = vmatprep.subr.bf16.mxu0 0
        %812 = vmatpush1.bf16.msra.mxu0 0
        %813 = vmatprep.subr.bf16.mxu0 0
        %814 = vmatpush1.bf16.msra.mxu0 0
        %815 = vmatprep.subr.bf16.mxu0 0
        %816 = vmatpush1.bf16.msra.mxu0 0
        %817 = vmatprep.subr.bf16.mxu0 0
        %818 = vmatpush1.bf16.msra.mxu0 0
        %819 = vmatprep.subr.bf16.mxu0 0
        %820 = vmatpush1.bf16.msra.mxu0 0
        %821 = vmatprep.subr.bf16.mxu0 0
        %822 = vmatpush1.bf16.msra.mxu0 0
        %823 = vmatprep.subr.bf16.mxu0 0
        %824 = vmatpush1.bf16.msra.mxu0 0
        %825 = vmatprep.subr.bf16.mxu0 0
        %826 = vmatpush1.bf16.msra.mxu0 0
        %827 = vmatprep.subr.bf16.mxu0 0
        %828 = vmatpush1.bf16.msra.mxu0 0
        %829 = vmatprep.subr.bf16.mxu0 0
        %830 = vmatpush1.bf16.msra.mxu0 0
        %831 = vmatprep.subr.bf16.mxu0 0
        %832 = vmatpush1.bf16.msra.mxu0 0
        %833 = vmatprep.mubr.bf16.mxu0 0
        %834 = vmatmul.mubr.bf16.gmra.mrb[0].mxu0 %v799
        %v835 = vpop.f32.mrb[0].mxu0
        %v836 = vadd.f32 0.0, %v835
        %v837 = vpop.f32.mrb[0].mxu0
        %v838 = vpop.f32.mrb[0].mxu0
        %v839 = vadd.f32 0.0, %v838
        %v840 = vpop.f32.mrb[0].mxu0
        %841 = vdwg.mxu0
        %v842 = vmul.f32 %v836, %v791
        %v843 = vmul.f32 %v839, %v792
        %845 = vrot.lane.b32.xlu0 %v723, 112
        %v846 = vpop.permute.xlu0 %845
        %847 = vrot.lane.b32.xlu0 %v724, 112
        %v848 = vpop.permute.xlu0 %847
        %v850 = vsel %vm725, %v846, 0
        %v853 = vsel %vm725, %v848, 0
        %855 = vmatprep.subr.bf16.mxu0 0
        %856 = vmatpush1.bf16.xpose.msra.mxu0 %v853
        %857 = vmatprep.subr.bf16.mxu0 0
        %858 = vmatpush1.bf16.xpose.msra.mxu0 0
        %859 = vmatprep.subr.bf16.mxu0 0
        %860 = vmatpush1.bf16.xpose.msra.mxu0 0
        %861 = vmatprep.subr.bf16.mxu0 0
        %862 = vmatpush1.bf16.xpose.msra.mxu0 0
        %863 = vmatprep.subr.bf16.mxu0 0
        %864 = vmatpush1.bf16.xpose.msra.mxu0 0
        %865 = vmatprep.subr.bf16.mxu0 0
        %866 = vmatpush1.bf16.xpose.msra.mxu0 0
        %867 = vmatprep.subr.bf16.mxu0 0
        %868 = vmatpush1.bf16.xpose.msra.mxu0 0
        %869 = vmatprep.subr.bf16.mxu0 0
        %870 = vmatpush1.bf16.xpose.msra.mxu0 0
        %871 = vmatprep.subr.bf16.mxu0 0
        %872 = vmatpush1.bf16.xpose.msra.mxu0 0
        %873 = vmatprep.subr.bf16.mxu0 0
        %874 = vmatpush1.bf16.xpose.msra.mxu0 0
        %875 = vmatprep.subr.bf16.mxu0 0
        %876 = vmatpush1.bf16.xpose.msra.mxu0 0
        %877 = vmatprep.subr.bf16.mxu0 0
        %878 = vmatpush1.bf16.xpose.msra.mxu0 0
        %879 = vmatprep.subr.bf16.mxu0 0
        %880 = vmatpush1.bf16.xpose.msra.mxu0 0
        %881 = vmatprep.subr.bf16.mxu0 0
        %882 = vmatpush1.bf16.xpose.msra.mxu0 0
        %883 = vmatprep.subr.bf16.mxu0 0
        %884 = vmatpush1.bf16.xpose.msra.mxu0 0
        %885 = vmatprep.subr.bf16.mxu0 0
        %886 = vmatpush1.bf16.xpose.msra.mxu0 0
        %887 = vmatprep.mubr.bf16.mxu0 0
        %888 = vmatmul.mubr.bf16.gmra.mrb[0].mxu0 %v850
        %v889 = vpop.f32.mrb[0].mxu0
        %v890 = vadd.f32 0.0, %v889
        %v891 = vpop.f32.mrb[0].mxu0
        %v892 = vpop.f32.mrb[0].mxu0
        %v893 = vadd.f32 0.0, %v892
        %v894 = vpop.f32.mrb[0].mxu0
        %895 = vdwg.mxu0
        %v896 = vsel %vm725, %v890, -inf
        %897 = vmax.xlane.f32.xlu0 %v896
        %v898 = vpop.xlane.xlu0 %897
        %v899 = vsel %vm725, %v893, -inf
        %900 = vmax.xlane.f32.xlu0 %v899
        %v901 = vpop.xlane.xlu0 %900
        %v902 = vsub.f32 %v890, %v898
        %v903 = vsub.f32 %v893, %v901
        %v904 = vmul.f32 %v902, 1.442695
        %v905 = vpow.pop %v904
        %v906 = vmul.f32 %v903, 1.442695
        %v907 = vpow.pop %v906
        %v908 = vsel %vm725, %v905, 0.0
        %909 = vadd.xlane.f32.xlu0 %v908
        %v910 = vpop.xlane.xlu0 %909
        %v911 = vsel %vm725, %v907, 0.0
        %912 = vadd.xlane.f32.xlu0 %v911
        %v913 = vpop.xlane.xlu0 %912
        %v914 = vrcp.pop %v910
        %v915 = vrcp.pop %v913
        %v916 = vpack.c.bf16 %v907, %v905
        %917 = vrot.lane.b32.xlu0 %v724, 48
        %v918 = vpop.permute.xlu0 %917
        %v921 = vsel %vm725, %v916, 0
        %923 = vmatprep.subr.bf16.mxu0 0
        %924 = vmatpush1.bf16.msra.mxu0 %v918
        %925 = vmatprep.subr.bf16.mxu0 0
        %926 = vmatpush1.bf16.msra.mxu0 0
        %927 = vmatprep.subr.bf16.mxu0 0
        %928 = vmatpush1.bf16.msra.mxu0 0
        %929 = vmatprep.subr.bf16.mxu0 0
        %930 = vmatpush1.bf16.msra.mxu0 0
        %931 = vmatprep.subr.bf16.mxu0 0
        %932 = vmatpush1.bf16.msra.mxu0 0
        %933 = vmatprep.subr.bf16.mxu0 0
        %934 = vmatpush1.bf16.msra.mxu0 0
        %935 = vmatprep.subr.bf16.mxu0 0
        %936 = vmatpush1.bf16.msra.mxu0 0
        %937 = vmatprep.subr.bf16.mxu0 0
        %938 = vmatpush1.bf16.msra.mxu0 0
        %939 = vmatprep.subr.bf16.mxu0 0
        %940 = vmatpush1.bf16.msra.mxu0 0
        %941 = vmatprep.subr.bf16.mxu0 0
        %942 = vmatpush1.bf16.msra.mxu0 0
        %943 = vmatprep.subr.bf16.mxu0 0
        %944 = vmatpush1.bf16.msra.mxu0 0
        %945 = vmatprep.subr.bf16.mxu0 0
        %946 = vmatpush1.bf16.msra.mxu0 0
        %947 = vmatprep.subr.bf16.mxu0 0
        %948 = vmatpush1.bf16.msra.mxu0 0
        %949 = vmatprep.subr.bf16.mxu0 0
        %950 = vmatpush1.bf16.msra.mxu0 0
        %951 = vmatprep.subr.bf16.mxu0 0
        %952 = vmatpush1.bf16.msra.mxu0 0
        %953 = vmatprep.subr.bf16.mxu0 0
        %954 = vmatpush1.bf16.msra.mxu0 0
        %955 = vmatprep.mubr.bf16.mxu0 0
        %956 = vmatmul.mubr.bf16.gmra.mrb[0].mxu0 %v921
        %v957 = vpop.f32.mrb[0].mxu0
        %v958 = vadd.f32 0.0, %v957
        %v959 = vpop.f32.mrb[0].mxu0
        %v960 = vpop.f32.mrb[0].mxu0
        %v961 = vadd.f32 0.0, %v960
        %v962 = vpop.f32.mrb[0].mxu0
        %963 = vdwg.mxu0
        %v964 = vmul.f32 %v958, %v914
        %v965 = vmul.f32 %v961, %v915
        %966 = vrot.lane.b32.xlu0 %v723, 96
        %v967 = vpop.permute.xlu0 %966
        %968 = vrot.lane.b32.xlu0 %v724, 96
        %v969 = vpop.permute.xlu0 %968
        %v971 = vsel %vm725, %v967, 0
        %v974 = vsel %vm725, %v969, 0
        %976 = vmatprep.subr.bf16.mxu0 0
        %977 = vmatpush1.bf16.xpose.msra.mxu0 %v974
        %978 = vmatprep.subr.bf16.mxu0 0
        %979 = vmatpush1.bf16.xpose.msra.mxu0 0
        %980 = vmatprep.subr.bf16.mxu0 0
        %981 = vmatpush1.bf16.xpose.msra.mxu0 0
        %982 = vmatprep.subr.bf16.mxu0 0
        %983 = vmatpush1.bf16.xpose.msra.mxu0 0
        %984 = vmatprep.subr.bf16.mxu0 0
        %985 = vmatpush1.bf16.xpose.msra.mxu0 0
        %986 = vmatprep.subr.bf16.mxu0 0
        %987 = vmatpush1.bf16.xpose.msra.mxu0 0
        %988 = vmatprep.subr.bf16.mxu0 0
        %989 = vmatpush1.bf16.xpose.msra.mxu0 0
        %990 = vmatprep.subr.bf16.mxu0 0
        %991 = vmatpush1.bf16.xpose.msra.mxu0 0
        %992 = vmatprep.subr.bf16.mxu0 0
        %993 = vmatpush1.bf16.xpose.msra.mxu0 0
        %994 = vmatprep.subr.bf16.mxu0 0
        %995 = vmatpush1.bf16.xpose.msra.mxu0 0
        %996 = vmatprep.subr.bf16.mxu0 0
        %997 = vmatpush1.bf16.xpose.msra.mxu0 0
        %998 = vmatprep.subr.bf16.mxu0 0
        %999 = vmatpush1.bf16.xpose.msra.mxu0 0
        %1000 = vmatprep.subr.bf16.mxu0 0
        %1001 = vmatpush1.bf16.xpose.msra.mxu0 0
        %1002 = vmatprep.subr.bf16.mxu0 0
        %1003 = vmatpush1.bf16.xpose.msra.mxu0 0
        %1004 = vmatprep.subr.bf16.mxu0 0
        %1005 = vmatpush1.bf16.xpose.msra.mxu0 0
        %1006 = vmatprep.subr.bf16.mxu0 0
        %1007 = vmatpush1.bf16.xpose.msra.mxu0 0
        %1008 = vmatprep.mubr.bf16.mxu0 0
        %1009 = vmatmul.mubr.bf16.gmra.mrb[0].mxu0 %v971
        %v1010 = vpop.f32.mrb[0].mxu0
        %v1011 = vadd.f32 0.0, %v1010
        %v1012 = vpop.f32.mrb[0].mxu0
        %v1013 = vpop.f32.mrb[0].mxu0
        %v1014 = vadd.f32 0.0, %v1013
        %v1015 = vpop.f32.mrb[0].mxu0
        %1016 = vdwg.mxu0
        %v1017 = vsel %vm725, %v1011, -inf
        %1018 = vmax.xlane.f32.xlu0 %v1017
        %v1019 = vpop.xlane.xlu0 %1018
        %v1020 = vsel %vm725, %v1014, -inf
        %1021 = vmax.xlane.f32.xlu0 %v1020
        %v1022 = vpop.xlane.xlu0 %1021
        %v1023 = vsub.f32 %v1011, %v1019
        %v1024 = vsub.f32 %v1014, %v1022
        %v1025 = vmul.f32 %v1023, 1.442695
        %v1026 = vpow.pop %v1025
        %v1027 = vmul.f32 %v1024, 1.442695
        %v1028 = vpow.pop %v1027
        %v1029 = vsel %vm725, %v1026, 0.0
        %1030 = vadd.xlane.f32.xlu0 %v1029
        %v1031 = vpop.xlane.xlu0 %1030
        %v1032 = vsel %vm725, %v1028, 0.0
        %1033 = vadd.xlane.f32.xlu0 %v1032
        %v1034 = vpop.xlane.xlu0 %1033
        %v1035 = vrcp.pop %v1031
        %v1036 = vrcp.pop %v1034
        %v1037 = vpack.c.bf16 %v1028, %v1026
        %1038 = vrot.lane.b32.xlu0 %v724, 32
        %v1039 = vpop.permute.xlu0 %1038
        %v1042 = vsel %vm725, %v1037, 0
        %1044 = vmatprep.subr.bf16.mxu0 0
        %1045 = vmatpush1.bf16.msra.mxu0 %v1039
        %1046 = vmatprep.subr.bf16.mxu0 0
        %1047 = vmatpush1.bf16.msra.mxu0 0
        %1048 = vmatprep.subr.bf16.mxu0 0
        %1049 = vmatpush1.bf16.msra.mxu0 0
        %1050 = vmatprep.subr.bf16.mxu0 0
        %1051 = vmatpush1.bf16.msra.mxu0 0
        %1052 = vmatprep.subr.bf16.mxu0 0
        %1053 = vmatpush1.bf16.msra.mxu0 0
        %1054 = vmatprep.subr.bf16.mxu0 0
        %1055 = vmatpush1.bf16.msra.mxu0 0
        %1056 = vmatprep.subr.bf16.mxu0 0
        %1057 = vmatpush1.bf16.msra.mxu0 0
        %1058 = vmatprep.subr.bf16.mxu0 0
        %1059 = vmatpush1.bf16.msra.mxu0 0
        %1060 = vmatprep.subr.bf16.mxu0 0
        %1061 = vmatpush1.bf16.msra.mxu0 0
        %1062 = vmatprep.subr.bf16.mxu0 0
        %1063 = vmatpush1.bf16.msra.mxu0 0
        %1064 = vmatprep.subr.bf16.mxu0 0
        %1065 = vmatpush1.bf16.msra.mxu0 0
        %1066 = vmatprep.subr.bf16.mxu0 0
        %1067 = vmatpush1.bf16.msra.mxu0 0
        %1068 = vmatprep.subr.bf16.mxu0 0
        %1069 = vmatpush1.bf16.msra.mxu0 0
        %1070 = vmatprep.subr.bf16.mxu0 0
        %1071 = vmatpush1.bf16.msra.mxu0 0
        %1072 = vmatprep.subr.bf16.mxu0 0
        %1073 = vmatpush1.bf16.msra.mxu0 0
        %1074 = vmatprep.subr.bf16.mxu0 0
        %1075 = vmatpush1.bf16.msra.mxu0 0
        %1076 = vmatprep.mubr.bf16.mxu0 0
        %1077 = vmatmul.mubr.bf16.gmra.mrb[0].mxu0 %v1042
        %v1078 = vpop.f32.mrb[0].mxu0
        %v1079 = vadd.f32 0.0, %v1078
        %v1080 = vpop.f32.mrb[0].mxu0
        %v1081 = vpop.f32.mrb[0].mxu0
        %v1082 = vadd.f32 0.0, %v1081
        %v1083 = vpop.f32.mrb[0].mxu0
        %1084 = vdwg.mxu0
        %v1085 = vmul.f32 %v1079, %v1035
        %v1086 = vmul.f32 %v1082, %v1036
        %1087 = vrot.lane.b32.xlu0 %v723, 80
        %v1088 = vpop.permute.xlu0 %1087
        %1089 = vrot.lane.b32.xlu0 %v724, 80
        %v1090 = vpop.permute.xlu0 %1089
        %v1092 = vsel %vm725, %v1088, 0
        %v1095 = vsel %vm725, %v1090, 0
        %1097 = vmatprep.subr.bf16.mxu0 0
        %1098 = vmatpush1.bf16.xpose.msra.mxu0 %v1095
        %1099 = vmatprep.subr.bf16.mxu0 0
        %1100 = vmatpush1.bf16.xpose.msra.mxu0 0
        %1101 = vmatprep.subr.bf16.mxu0 0
        %1102 = vmatpush1.bf16.xpose.msra.mxu0 0
        %1103 = vmatprep.subr.bf16.mxu0 0
        %1104 = vmatpush1.bf16.xpose.msra.mxu0 0
        %1105 = vmatprep.subr.bf16.mxu0 0
        %1106 = vmatpush1.bf16.xpose.msra.mxu0 0
        %1107 = vmatprep.subr.bf16.mxu0 0
        %1108 = vmatpush1.bf16.xpose.msra.mxu0 0
        %1109 = vmatprep.subr.bf16.mxu0 0
        %1110 = vmatpush1.bf16.xpose.msra.mxu0 0
        %1111 = vmatprep.subr.bf16.mxu0 0
        %1112 = vmatpush1.bf16.xpose.msra.mxu0 0
        %1113 = vmatprep.subr.bf16.mxu0 0
        %1114 = vmatpush1.bf16.xpose.msra.mxu0 0
        %1115 = vmatprep.subr.bf16.mxu0 0
        %1116 = vmatpush1.bf16.xpose.msra.mxu0 0
        %1117 = vmatprep.subr.bf16.mxu0 0
        %1118 = vmatpush1.bf16.xpose.msra.mxu0 0
        %1119 = vmatprep.subr.bf16.mxu0 0
        %1120 = vmatpush1.bf16.xpose.msra.mxu0 0
        %1121 = vmatprep.subr.bf16.mxu0 0
        %1122 = vmatpush1.bf16.xpose.msra.mxu0 0
        %1123 = vmatprep.subr.bf16.mxu0 0
        %1124 = vmatpush1.bf16.xpose.msra.mxu0 0
        %1125 = vmatprep.subr.bf16.mxu0 0
        %1126 = vmatpush1.bf16.xpose.msra.mxu0 0
        %1127 = vmatprep.subr.bf16.mxu0 0
        %1128 = vmatpush1.bf16.xpose.msra.mxu0 0
        %1129 = vmatprep.mubr.bf16.mxu0 0
        %1130 = vmatmul.mubr.bf16.gmra.mrb[0].mxu0 %v1092
        %v1131 = vpop.f32.mrb[0].mxu0
        %v1132 = vadd.f32 0.0, %v1131
        %v1133 = vpop.f32.mrb[0].mxu0
        %v1134 = vpop.f32.mrb[0].mxu0
        %v1135 = vadd.f32 0.0, %v1134
        %v1136 = vpop.f32.mrb[0].mxu0
        %1137 = vdwg.mxu0
        %v1138 = vsel %vm725, %v1132, -inf
        %1139 = vmax.xlane.f32.xlu0 %v1138
        %v1140 = vpop.xlane.xlu0 %1139
        %v1141 = vsel %vm725, %v1135, -inf
        %1142 = vmax.xlane.f32.xlu0 %v1141
        %v1143 = vpop.xlane.xlu0 %1142
        %v1144 = vsub.f32 %v1132, %v1140
        %v1145 = vsub.f32 %v1135, %v1143
        %v1146 = vmul.f32 %v1144, 1.442695
        %v1147 = vpow.pop %v1146
        %v1148 = vmul.f32 %v1145, 1.442695
        %v1149 = vpow.pop %v1148
        %v1150 = vsel %vm725, %v1147, 0.0
        %1151 = vadd.xlane.f32.xlu0 %v1150
        %v1152 = vpop.xlane.xlu0 %1151
        %v1153 = vsel %vm725, %v1149, 0.0
        %1154 = vadd.xlane.f32.xlu0 %v1153
        %v1155 = vpop.xlane.xlu0 %1154
        %v1156 = vrcp.pop %v1152
        %v1157 = vrcp.pop %v1155
        %v1158 = vpack.c.bf16 %v1149, %v1147
        %1159 = vrot.lane.b32.xlu0 %v724, 16
        %v1160 = vpop.permute.xlu0 %1159
        %v1163 = vsel %vm725, %v1158, 0
        %1165 = vmatprep.subr.bf16.mxu0 0
        %1166 = vmatpush1.bf16.msra.mxu0 %v1160
        %1167 = vmatprep.subr.bf16.mxu0 0
        %1168 = vmatpush1.bf16.msra.mxu0 0
        %1169 = vmatprep.subr.bf16.mxu0 0
        %1170 = vmatpush1.bf16.msra.mxu0 0
        %1171 = vmatprep.subr.bf16.mxu0 0
        %1172 = vmatpush1.bf16.msra.mxu0 0
        %1173 = vmatprep.subr.bf16.mxu0 0
        %1174 = vmatpush1.bf16.msra.mxu0 0
        %1175 = vmatprep.subr.bf16.mxu0 0
        %1176 = vmatpush1.bf16.msra.mxu0 0
        %1177 = vmatprep.subr.bf16.mxu0 0
        %1178 = vmatpush1.bf16.msra.mxu0 0
        %1179 = vmatprep.subr.bf16.mxu0 0
        %1180 = vmatpush1.bf16.msra.mxu0 0
        %1181 = vmatprep.subr.bf16.mxu0 0
        %1182 = vmatpush1.bf16.msra.mxu0 0
        %1183 = vmatprep.subr.bf16.mxu0 0
        %1184 = vmatpush1.bf16.msra.mxu0 0
        %1185 = vmatprep.subr.bf16.mxu0 0
        %1186 = vmatpush1.bf16.msra.mxu0 0
        %1187 = vmatprep.subr.bf16.mxu0 0
        %1188 = vmatpush1.bf16.msra.mxu0 0
        %1189 = vmatprep.subr.bf16.mxu0 0
        %1190 = vmatpush1.bf16.msra.mxu0 0
        %1191 = vmatprep.subr.bf16.mxu0 0
        %1192 = vmatpush1.bf16.msra.mxu0 0
        %1193 = vmatprep.subr.bf16.mxu0 0
        %1194 = vmatpush1.bf16.msra.mxu0 0
        %1195 = vmatprep.subr.bf16.mxu0 0
        %1196 = vmatpush1.bf16.msra.mxu0 0
        %1197 = vmatprep.mubr.bf16.mxu0 0
        %1198 = vmatmul.mubr.bf16.gmra.mrb[0].mxu0 %v1163
        %v1199 = vpop.f32.mrb[0].mxu0
        %v1200 = vadd.f32 0.0, %v1199
        %v1201 = vpop.f32.mrb[0].mxu0
        %v1202 = vpop.f32.mrb[0].mxu0
        %v1203 = vadd.f32 0.0, %v1202
        %v1204 = vpop.f32.mrb[0].mxu0
        %1205 = vdwg.mxu0
        %v1206 = vmul.f32 %v1200, %v1156
        %v1207 = vmul.f32 %v1203, %v1157
        %1210 = vrot.lane.b32.xlu0 %v964, 16
        %v1211 = vpop.permute.xlu0 %1210
        %1212 = vrot.lane.b32.xlu0 %v965, 16
        %v1213 = vpop.permute.xlu0 %1212
        %1218 = vrot.lane.b32.xlu0 %v1085, 32
        %v1219 = vpop.permute.xlu0 %1218
        %1220 = vrot.lane.b32.xlu0 %v1086, 32
        %v1221 = vpop.permute.xlu0 %1220
        %1226 = vrot.lane.b32.xlu0 %v1206, 48
        %v1227 = vpop.permute.xlu0 %1226
        %1228 = vrot.lane.b32.xlu0 %v1207, 48
        %v1229 = vpop.permute.xlu0 %1228
        %v1232 = vsel %vm725, %v842, %v1211
        %v1233 = vsel %vm725, %v843, %v1213
        %vm1234 = vcmask 261120
        %v1235 = vsel %vm1234, %v1232, %v1219
        %v1236 = vsel %vm1234, %v1233, %v1221
        %vm1237 = vcmask 392192
        %v1238 = vsel %vm1237, %v1235, %v1227
        %v1239 = vsel %vm1237, %v1236, %v1229
        %v1240 = vpack.c.bf16 %v1239, %v1238
        %v1241 = vld [vmem:[%s5] sm:$0xf]
        %v1242 = vld [vmem:[%s5 + $0x4] sm:$0xf]
        %v1243 = vld [vmem:[%s5 + $0x8] sm:$0xf]
        %v1244 = vld [vmem:[%s5 + $0xc] sm:$0xf]
        %v1245 = vld [vmem:[%s5 + $0x10] sm:$0xf]
        %v1246 = vld [vmem:[%s5 + $0x14] sm:$0xf]
        %v1247 = vld [vmem:[%s5 + $0x18] sm:$0xf]
        %v1248 = vld [vmem:[%s5 + $0x1c] sm:$0xf]
        %v1249 = vld [vmem:[%s6] sm:$0x1]
        %v1251 = vlaneseq
        %v1252 = vshrl.u32 %v1251, 7
        %v1253 = vsub.s32 0, %v1252
        %v1254 = vrot.slane %v1249, %v1253
        %v1264 = vunpack.c.l.b16 %v1241
        %v1265 = vunpack.c.l.b16 %v1242
        %v1266 = vunpack.c.l.b16 %v1243
        %v1267 = vunpack.c.l.b16 %v1244
        %v1268 = vunpack.c.l.b16 %v1245
        %v1269 = vunpack.c.l.b16 %v1246
        %v1270 = vunpack.c.l.b16 %v1247
        %v1271 = vunpack.c.l.b16 %v1248
        %v1272 = vpack.c.b16 %v1265, %v1264
        %v1273 = vpack.c.b16 %v1267, %v1266
        %v1274 = vpack.c.b16 %v1269, %v1268
        %v1275 = vpack.c.b16 %v1271, %v1270
        %vm1280 = vcmask 523264
        %v1282 = vsel %vm1280, %v1240, 0
        %1284 = vmatprep.subr.bf16.mxu0 0
        %1285 = vmatpush1.bf16.msra.mxu0 %v1272
        %1286 = vmatprep.subr.bf16.mxu0 0
        %1287 = vmatpush1.bf16.msra.mxu0 %v1273
        %1288 = vmatprep.subr.bf16.mxu0 0
        %1289 = vmatpush1.bf16.msra.mxu0 %v1274
        %1290 = vmatprep.subr.bf16.mxu0 0
        %1291 = vmatpush1.bf16.msra.mxu0 %v1275
        %1292 = vmatprep.subr.bf16.mxu0 0
        %1293 = vmatpush1.bf16.msra.mxu0 0
        %1294 = vmatprep.subr.bf16.mxu0 0
        %1295 = vmatpush1.bf16.msra.mxu0 0
        %1296 = vmatprep.subr.bf16.mxu0 0
        %1297 = vmatpush1.bf16.msra.mxu0 0
        %1298 = vmatprep.subr.bf16.mxu0 0
        %1299 = vmatpush1.bf16.msra.mxu0 0
        %1300 = vmatprep.subr.bf16.mxu0 0
        %1301 = vmatpush1.bf16.msra.mxu0 0
        %1302 = vmatprep.subr.bf16.mxu0 0
        %1303 = vmatpush1.bf16.msra.mxu0 0
        %1304 = vmatprep.subr.bf16.mxu0 0
        %1305 = vmatpush1.bf16.msra.mxu0 0
        %1306 = vmatprep.subr.bf16.mxu0 0
        %1307 = vmatpush1.bf16.msra.mxu0 0
        %1308 = vmatprep.subr.bf16.mxu0 0
        %1309 = vmatpush1.bf16.msra.mxu0 0
        %1310 = vmatprep.subr.bf16.mxu0 0
        %1311 = vmatpush1.bf16.msra.mxu0 0
        %1312 = vmatprep.subr.bf16.mxu0 0
        %1313 = vmatpush1.bf16.msra.mxu0 0
        %1314 = vmatprep.subr.bf16.mxu0 0
        %1315 = vmatpush1.bf16.msra.mxu0 0
        %1316 = vmatprep.mubr.bf16.mxu0 0
        %1317 = vmatmul.mubr.bf16.gmra.mrb[0].mxu0 %v1282
        %v1318 = vpop.f32.mrb[0].mxu0
        %v1319 = vadd.f32 %v1254, %v1318
        %v1320 = vpop.f32.mrb[0].mxu0
        %v1321 = vpop.f32.mrb[0].mxu0
        %v1322 = vadd.f32 %v1254, %v1321
        %v1323 = vpop.f32.mrb[0].mxu0
        %1324 = vdwg.mxu0
        %v1325 = vld [vmem:[%s7] sm:$0x1]
        %v1327 = vlaneseq
        %v1328 = vshrl.u32 %v1327, 7
        %v1329 = vsub.s32 0, %v1328
        %v1330 = vrot.slane %v1325, %v1329
        %v1332 = vmul.f32 %v1319, %v1330
        %v1333 = vmul.f32 %v1322, %v1330
        %v1334 = vadd.f32 %v717, %v1332
        %v1335 = vadd.f32 %v718, %v1333
        %v1336 = vsel %vm1280, %v1334, 0.0
        %1337 = vadd.xlane.f32.xlu0 %v1336
        %v1338 = vpop.xlane.xlu0 %1337
        %v1339 = vsel %vm1280, %v1335, 0.0
        %1340 = vadd.xlane.f32.xlu0 %v1339
        %v1341 = vpop.xlane.xlu0 %1340
        %v1342 = vrcp.pop 64.0
        %v1343 = vmul.f32 %v1338, %v1342
        %v1344 = vmul.f32 %v1341, %v1342
        %v1345 = vsub.f32 %v1334, %v1343
        %v1346 = vsub.f32 %v1335, %v1344
        %v1347 = vmul.f32 %v1345, %v1345
        %v1348 = vmul.f32 %v1346, %v1346
        %v1349 = vsel %vm1280, %v1347, 0.0
        %1350 = vadd.xlane.f32.xlu0 %v1349
        %v1351 = vpop.xlane.xlu0 %1350
        %v1352 = vsel %vm1280, %v1348, 0.0
        %1353 = vadd.xlane.f32.xlu0 %v1352
        %v1354 = vpop.xlane.xlu0 %1353
        %v1355 = vmul.f32 %v1351, %v1342
        %v1356 = vmul.f32 %v1354, %v1342
        %v1357 = vadd.f32 %v1355, 1e-05
        %v1358 = vadd.f32 %v1356, 1e-05
        %v1359 = vrsqrt.pop %v1357
        %v1360 = vrsqrt.pop %v1358
        %v1361 = vmul.f32 %v1345, %v1359
        %v1362 = vmul.f32 %v1346, %v1360
        %v1363 = vld [vmem:[%s8] sm:$0x1]
        %v1365 = vlaneseq
        %v1366 = vshrl.u32 %v1365, 7
        %v1367 = vsub.s32 0, %v1366
        %v1368 = vrot.slane %v1363, %v1367
        %v1370 = vmul.f32 %v1361, %v1368
        %v1371 = vmul.f32 %v1362, %v1368
        %v1372 = vld [vmem:[%s9] sm:$0x1]
        %v1374 = vlaneseq
        %v1375 = vshrl.u32 %v1374, 7
        %v1376 = vsub.s32 0, %v1375
        %v1377 = vrot.slane %v1372, %v1376
        %v1379 = vadd.f32 %v1370, %v1377
        %v1380 = vadd.f32 %v1371, %v1377
        %v1381 = vpack.c.bf16 %v1380, %v1379
        %v1382 = vld [vmem:[%s10] sm:$0xff]
        %v1383 = vld [vmem:[%s10 + $0x8] sm:$0xff]
        %v1384 = vld [vmem:[%s10 + $0x10] sm:$0xff]
        %v1385 = vld [vmem:[%s10 + $0x18] sm:$0xff]
        %v1386 = vld [vmem:[%s10 + $0x20] sm:$0xff]
        %v1387 = vld [vmem:[%s10 + $0x28] sm:$0xff]
        %v1388 = vld [vmem:[%s10 + $0x30] sm:$0xff]
        %v1389 = vld [vmem:[%s10 + $0x38] sm:$0xff]
        %v1390 = vld [vmem:[%s11] sm:$0x3]
        %v1392 = vlaneseq
        %v1393 = vshrl.u32 %v1392, 7
        %v1394 = vsub.s32 0, %v1393
        %v1395 = vrot.slane %v1390, %v1394
        %v1396 = vlaneseq
        %v1397 = vshrl.u32 %v1396, 7
        %v1398 = vsub.s32 1, %v1397
        %v1399 = vrot.slane %v1390, %v1398
        %v1410 = vunpack.c.l.b16 %v1382
        %v1411 = vunpack.c.h.b16 %v1382
        %v1412 = vunpack.c.l.b16 %v1383
        %v1413 = vunpack.c.h.b16 %v1383
        %v1414 = vunpack.c.l.b16 %v1384
        %v1415 = vunpack.c.h.b16 %v1384
        %v1416 = vunpack.c.l.b16 %v1385
        %v1417 = vunpack.c.h.b16 %v1385
        %v1418 = vunpack.c.l.b16 %v1386
        %v1419 = vunpack.c.h.b16 %v1386
        %v1420 = vunpack.c.l.b16 %v1387
        %v1421 = vunpack.c.h.b16 %v1387
        %v1422 = vunpack.c.l.b16 %v1388
        %v1423 = vunpack.c.h.b16 %v1388
        %v1424 = vunpack.c.l.b16 %v1389
        %v1425 = vunpack.c.h.b16 %v1389
        %v1426 = vpack.c.b16 %v1412, %v1410
        %v1427 = vpack.c.b16 %v1413, %v1411
        %v1428 = vpack.c.b16 %v1416, %v1414
        %v1429 = vpack.c.b16 %v1417, %v1415
        %v1430 = vpack.c.b16 %v1420, %v1418
        %v1431 = vpack.c.b16 %v1421, %v1419
        %v1432 = vpack.c.b16 %v1424, %v1422
        %v1433 = vpack.c.b16 %v1425, %v1423
        %v1443 = vsel %vm1280, %v1381, 0
        %1445 = vmatprep.subr.bf16.mxu0 %v1427
        %1446 = vmatpush1.bf16.msra.mxu0 %v1426
        %1447 = vmatprep.subr.bf16.mxu0 %v1429
        %1448 = vmatpush1.bf16.msra.mxu0 %v1428
        %1449 = vmatprep.subr.bf16.mxu0 %v1431
        %1450 = vmatpush1.bf16.msra.mxu0 %v1430
        %1451 = vmatprep.subr.bf16.mxu0 %v1433
        %1452 = vmatpush1.bf16.msra.mxu0 %v1432
        %1453 = vmatprep.subr.bf16.mxu0 0
        %1454 = vmatpush1.bf16.msra.mxu0 0
        %1455 = vmatprep.subr.bf16.mxu0 0
        %1456 = vmatpush1.bf16.msra.mxu0 0
        %1457 = vmatprep.subr.bf16.mxu0 0
        %1458 = vmatpush1.bf16.msra.mxu0 0
        %1459 = vmatprep.subr.bf16.mxu0 0
        %1460 = vmatpush1.bf16.msra.mxu0 0
        %1461 = vmatprep.subr.bf16.mxu0 0
        %1462 = vmatpush1.bf16.msra.mxu0 0
        %1463 = vmatprep.subr.bf16.mxu0 0
        %1464 = vmatpush1.bf16.msra.mxu0 0
        %1465 = vmatprep.subr.bf16.mxu0 0
        %1466 = vmatpush1.bf16.msra.mxu0 0
        %1467 = vmatprep.subr.bf16.mxu0 0
        %1468 = vmatpush1.bf16.msra.mxu0 0
        %1469 = vmatprep.subr.bf16.mxu0 0
        %1470 = vmatpush1.bf16.msra.mxu0 0
        %1471 = vmatprep.subr.bf16.mxu0 0
        %1472 = vmatpush1.bf16.msra.mxu0 0
        %1473 = vmatprep.subr.bf16.mxu0 0
        %1474 = vmatpush1.bf16.msra.mxu0 0
        %1475 = vmatprep.subr.bf16.mxu0 0
        %1476 = vmatpush1.bf16.msra.mxu0 0
        %1477 = vmatprep.mubr.bf16.mxu0 0
        %1478 = vmatmul.mubr.bf16.gmra.mrb[0].mxu0 %v1443
        %v1479 = vpop.f32.mrb[0].mxu0
        %v1480 = vadd.f32 %v1395, %v1479
        %v1481 = vpop.f32.mrb[0].mxu0
        %v1482 = vadd.f32 %v1399, %v1481
        %v1483 = vpop.f32.mrb[0].mxu0
        %v1484 = vadd.f32 %v1395, %v1483
        %v1485 = vpop.f32.mrb[0].mxu0
        %v1486 = vadd.f32 %v1399, %v1485
        %1487 = vdwg.mxu0
        %v1488 = vmul.f32 %v1480, %v1480
        %v1489 = vmul.f32 %v1482, %v1482
        %v1490 = vmul.f32 %v1484, %v1484
        %v1491 = vmul.f32 %v1486, %v1486
        %v1492 = vmul.f32 %v1480, %v1488
        %v1493 = vmul.f32 %v1482, %v1489
        %v1494 = vmul.f32 %v1484, %v1490
        %v1495 = vmul.f32 %v1486, %v1491
        %v1496 = vmul.f32 %v1492, 0.044715
        %v1497 = vmul.f32 %v1493, 0.044715
        %v1498 = vmul.f32 %v1494, 0.044715
        %v1499 = vmul.f32 %v1495, 0.044715
        %v1500 = vadd.f32 %v1480, %v1496
        %v1501 = vadd.f32 %v1482, %v1497
        %v1502 = vadd.f32 %v1484, %v1498
        %v1503 = vadd.f32 %v1486, %v1499
        %v1504 = vmul.f32 %v1500, 0.7978846
        %v1505 = vmul.f32 %v1501, 0.7978846
        %v1506 = vmul.f32 %v1502, 0.7978846
        %v1507 = vmul.f32 %v1503, 0.7978846
        %v1508 = vtanh.pop %v1504
        %v1509 = vtanh.pop %v1505
        %v1510 = vtanh.pop %v1506
        %v1511 = vtanh.pop %v1507
        %v1512 = vadd.f32 %v1508, 1.0
        %v1513 = vadd.f32 %v1509, 1.0
        %v1514 = vadd.f32 %v1510, 1.0
        %v1515 = vadd.f32 %v1511, 1.0
        %v1516 = vmul.f32 %v1512, 0.5
        %v1517 = vmul.f32 %v1513, 0.5
        %v1518 = vmul.f32 %v1514, 0.5
        %v1519 = vmul.f32 %v1515, 0.5
        %v1520 = vmul.f32 %v1480, %v1516
        %v1521 = vmul.f32 %v1482, %v1517
        %v1522 = vmul.f32 %v1484, %v1518
        %v1523 = vmul.f32 %v1486, %v1519
        %v1524 = vpack.c.bf16 %v1522, %v1520
        %v1525 = vpack.c.bf16 %v1523, %v1521
        %v1526 = vld [vmem:[%s12] sm:$0xf]
        %v1527 = vld [vmem:[%s12 + $0x4] sm:$0xf]
        %v1528 = vld [vmem:[%s12 + $0x8] sm:$0xf]
        %v1529 = vld [vmem:[%s12 + $0xc] sm:$0xf]
        %v1530 = vld [vmem:[%s12 + $0x10] sm:$0xf]
        %v1531 = vld [vmem:[%s12 + $0x14] sm:$0xf]
        %v1532 = vld [vmem:[%s12 + $0x18] sm:$0xf]
        %v1533 = vld [vmem:[%s12 + $0x1c] sm:$0xf]
        %v1534 = vld [vmem:[%s12 + $0x20] sm:$0xf]
        %v1535 = vld [vmem:[%s12 + $0x24] sm:$0xf]
        %v1536 = vld [vmem:[%s12 + $0x28] sm:$0xf]
        %v1537 = vld [vmem:[%s12 + $0x2c] sm:$0xf]
        %v1538 = vld [vmem:[%s12 + $0x30] sm:$0xf]
        %v1539 = vld [vmem:[%s12 + $0x34] sm:$0xf]
        %v1540 = vld [vmem:[%s12 + $0x38] sm:$0xf]
        %v1541 = vld [vmem:[%s12 + $0x3c] sm:$0xf]
        %v1542 = vld [vmem:[%s12 + $0x40] sm:$0xf]
        %v1543 = vld [vmem:[%s12 + $0x44] sm:$0xf]
        %v1544 = vld [vmem:[%s12 + $0x48] sm:$0xf]
        %v1545 = vld [vmem:[%s12 + $0x4c] sm:$0xf]
        %v1546 = vld [vmem:[%s12 + $0x50] sm:$0xf]
        %v1547 = vld [vmem:[%s12 + $0x54] sm:$0xf]
        %v1548 = vld [vmem:[%s12 + $0x58] sm:$0xf]
        %v1549 = vld [vmem:[%s12 + $0x5c] sm:$0xf]
        %v1550 = vld [vmem:[%s12 + $0x60] sm:$0xf]
        %v1551 = vld [vmem:[%s12 + $0x64] sm:$0xf]
        %v1552 = vld [vmem:[%s12 + $0x68] sm:$0xf]
        %v1553 = vld [vmem:[%s12 + $0x6c] sm:$0xf]
        %v1554 = vld [vmem:[%s12 + $0x70] sm:$0xf]
        %v1555 = vld [vmem:[%s12 + $0x74] sm:$0xf]
        %v1556 = vld [vmem:[%s12 + $0x78] sm:$0xf]
        %v1557 = vld [vmem:[%s12 + $0x7c] sm:$0xf]
        %v1558 = vld [vmem:[%s13] sm:$0x1]
        %v1560 = vlaneseq
        %v1561 = vshrl.u32 %v1560, 7
        %v1562 = vsub.s32 0, %v1561
        %v1563 = vrot.slane %v1558, %v1562
        %v1597 = vunpack.c.l.b16 %v1526
        %v1598 = vunpack.c.l.b16 %v1527
        %v1599 = vunpack.c.l.b16 %v1528
        %v1600 = vunpack.c.l.b16 %v1529
        %v1601 = vunpack.c.l.b16 %v1530
        %v1602 = vunpack.c.l.b16 %v1531
        %v1603 = vunpack.c.l.b16 %v1532
        %v1604 = vunpack.c.l.b16 %v1533
        %v1605 = vunpack.c.l.b16 %v1534
        %v1606 = vunpack.c.l.b16 %v1535
        %v1607 = vunpack.c.l.b16 %v1536
        %v1608 = vunpack.c.l.b16 %v1537
        %v1609 = vunpack.c.l.b16 %v1538
        %v1610 = vunpack.c.l.b16 %v1539
        %v1611 = vunpack.c.l.b16 %v1540
        %v1612 = vunpack.c.l.b16 %v1541
        %v1613 = vunpack.c.l.b16 %v1542
        %v1614 = vunpack.c.l.b16 %v1543
        %v1615 = vunpack.c.l.b16 %v1544
        %v1616 = vunpack.c.l.b16 %v1545
        %v1617 = vunpack.c.l.b16 %v1546
        %v1618 = vunpack.c.l.b16 %v1547
        %v1619 = vunpack.c.l.b16 %v1548
        %v1620 = vunpack.c.l.b16 %v1549
        %v1621 = vunpack.c.l.b16 %v1550
        %v1622 = vunpack.c.l.b16 %v1551
        %v1623 = vunpack.c.l.b16 %v1552
        %v1624 = vunpack.c.l.b16 %v1553
        %v1625 = vunpack.c.l.b16 %v1554
        %v1626 = vunpack.c.l.b16 %v1555
        %v1627 = vunpack.c.l.b16 %v1556
        %v1628 = vunpack.c.l.b16 %v1557
        %v1629 = vpack.c.b16 %v1598, %v1597
        %v1630 = vpack.c.b16 %v1600, %v1599
        %v1631 = vpack.c.b16 %v1602, %v1601
        %v1632 = vpack.c.b16 %v1604, %v1603
        %v1633 = vpack.c.b16 %v1606, %v1605
        %v1634 = vpack.c.b16 %v1608, %v1607
        %v1635 = vpack.c.b16 %v1610, %v1609
        %v1636 = vpack.c.b16 %v1612, %v1611
        %v1637 = vpack.c.b16 %v1614, %v1613
        %v1638 = vpack.c.b16 %v1616, %v1615
        %v1639 = vpack.c.b16 %v1618, %v1617
        %v1640 = vpack.c.b16 %v1620, %v1619
        %v1641 = vpack.c.b16 %v1622, %v1621
        %v1642 = vpack.c.b16 %v1624, %v1623
        %v1643 = vpack.c.b16 %v1626, %v1625
        %v1644 = vpack.c.b16 %v1628, %v1627
        %1661 = vmatprep.subr.bf16.mxu0 0
        %1662 = vmatpush1.bf16.msra.mxu0 %v1629
        %1663 = vmatprep.subr.bf16.mxu0 0
        %1664 = vmatpush1.bf16.msra.mxu0 %v1630
        %1665 = vmatprep.subr.bf16.mxu0 0
        %1666 = vmatpush1.bf16.msra.mxu0 %v1631
        %1667 = vmatprep.subr.bf16.mxu0 0
        %1668 = vmatpush1.bf16.msra.mxu0 %v1632
        %1669 = vmatprep.subr.bf16.mxu0 0
        %1670 = vmatpush1.bf16.msra.mxu0 %v1633
        %1671 = vmatprep.subr.bf16.mxu0 0
        %1672 = vmatpush1.bf16.msra.mxu0 %v1634
        %1673 = vmatprep.subr.bf16.mxu0 0
        %1674 = vmatpush1.bf16.msra.mxu0 %v1635
        %1675 = vmatprep.subr.bf16.mxu0 0
        %1676 = vmatpush1.bf16.msra.mxu0 %v1636
        %1677 = vmatprep.subr.bf16.mxu0 0
        %1678 = vmatpush1.bf16.msra.mxu0 %v1637
        %1679 = vmatprep.subr.bf16.mxu0 0
        %1680 = vmatpush1.bf16.msra.mxu0 %v1638
        %1681 = vmatprep.subr.bf16.mxu0 0
        %1682 = vmatpush1.bf16.msra.mxu0 %v1639
        %1683 = vmatprep.subr.bf16.mxu0 0
        %1684 = vmatpush1.bf16.msra.mxu0 %v1640
        %1685 = vmatprep.subr.bf16.mxu0 0
        %1686 = vmatpush1.bf16.msra.mxu0 %v1641
        %1687 = vmatprep.subr.bf16.mxu0 0
        %1688 = vmatpush1.bf16.msra.mxu0 %v1642
        %1689 = vmatprep.subr.bf16.mxu0 0
        %1690 = vmatpush1.bf16.msra.mxu0 %v1643
        %1691 = vmatprep.subr.bf16.mxu0 0
        %1692 = vmatpush1.bf16.msra.mxu0 %v1644
        %1693 = vmatprep.mubr.bf16.mxu0 %v1525
        %1694 = vmatmul.mubr.bf16.gmra.mrb[0].mxu0 %v1524
        %v1695 = vpop.f32.mrb[0].mxu0
        %v1696 = vadd.f32 %v1563, %v1695
        %v1697 = vpop.f32.mrb[0].mxu0
        %v1698 = vpop.f32.mrb[0].mxu0
        %v1699 = vadd.f32 %v1563, %v1698
        %v1700 = vpop.f32.mrb[0].mxu0
        %1701 = vdwg.mxu0
        %v1702 = vld [vmem:[%s14] sm:$0x1]
        %v1704 = vlaneseq
        %v1705 = vshrl.u32 %v1704, 7
        %v1706 = vsub.s32 0, %v1705
        %v1707 = vrot.slane %v1702, %v1706
        %v1709 = vmul.f32 %v1696, %v1707
        %v1710 = vmul.f32 %v1699, %v1707
        %v1711 = vadd.f32 %v1334, %v1709
        %v1712 = vadd.f32 %v1335, %v1710
        %1713 = vst.msk [vmem:[%s501] sm:$0xff] %vm1280, %v1711
        %1714 = vst.msk [vmem:[%s501 + $0x8] sm:$0xff] %vm1280, %v1712
        %s1715 = sand.u32 %s371, 1
        %s1716 = scalar_lea.sflag [#allocation5], %s1715
        %s1717 = sand.u32 %s371, 1
        %s1718 = smul.addr %s1717, 16
        %s1719 = scalar_lea.vmem [#allocation4], %s1718
        // Predicated region
        $region85: #{tpu_custom_call.1} parent=79 // pred_check
          %p1720 = pneg %p381
        $region86: #{tpu_custom_call.1} parent=79 // pred_check_branch
          %1722 = sbr.rel (%p1720) target = $region88
        $region87: #{tpu_custom_call.1} parent=79 // pred_region
          %s1723 = smul.u32 2, %s34
          %s1725 = ssub.s32 256, 256
          %1726 = vsyncadd %s1716, %s1725
          %s1727 = smul.addr %s33, 2
          %s1728 = sadd.s32 %s1723, %s1727
          %s1729 = smul.addr %s1728, 128
          %s1730 = scalar_lea.hbm %s15, %s1729
          %s1731 = sshll.u32 %s1719, 4
          %s1732 = int_to_ptr.vmem [resolvable:$true] %s1731
          %1737 = dma.vmem_to_hbm [thread:$0]  %s1732, 256, %s1730, %s1716, 128, 128, 8
        $region88: #{tpu_custom_call.1} parent=79 // pred_fallthru
          _
      $region80: #{tpu_custom_call.1} parent=5 // pred_fallthru
        _
      %p1738 = scmp.le.s32.totalorder 2, %s24
      // Predicated region
      $region89: #{tpu_custom_call.1} parent=5 // pred_check
        %p1739 = pneg %p1738
      $region90: #{tpu_custom_call.1} parent=5 // pred_check_branch
        %1741 = sbr.rel (%p1739) target = $region92
      $region91: #{tpu_custom_call.1} parent=5 // pred_region
        %s1742 = ssub.s32 %s24, 2
        // Predicated region
        $region93: #{tpu_custom_call.1} parent=91 // pred_check
          %p1743 = pneg %p387
        $region94: #{tpu_custom_call.1} parent=91 // pred_check_branch
          %1745 = sbr.rel (%p1743) target = $region96
        $region95: #{tpu_custom_call.1} parent=91 // pred_region
          %s1746 = sand.u32 %s372, 1
          %s1747 = scalar_lea.sflag [#allocation5], %s1746
          %s1748 = sand.u32 %s372, 1
          %s1749 = smul.addr %s1748, 16
          %s1750 = scalar_lea.vmem [#allocation4], %s1749
          %1751 = dma.done %s1747, 256
        $region96: #{tpu_custom_call.1} parent=91 // pred_fallthru
          _
      $region92: #{tpu_custom_call.1} parent=5 // pred_fallthru
        _
    $region6: #{tpu_custom_call.1} parent=1 // loop_footer
      %s28 = sadd.s32 1, %s24
    $region7: #{tpu_custom_call.1} parent=1 // loop_footer_branch
      %23 = sbr.rel target = $region3
    $region8: #{tpu_custom_call.1} parent=1 // loop_exit
      _
    %1752 = vsyncpa [#allocation5], 1
    %s1753 = scalar_lea.sflag [#allocation5], 1
    %1754 = vsyncpa %s1753, 1

</llo_original>
